<compile_context>
chip_gen: v5e
topology: v5e:2x2
jax: 0.10.0
libtpu: 0.0.40
codegen_flags: <defaults>
</compile_context>

<pallas_src>
from functools import partial

import jax
import jax.numpy as jnp
import numpy as np
from jax.experimental import pallas as pl
from jax.experimental.pallas import tpu as pltpu


# ----------------------------------------------------------------------------- kernel
def _gated_conv_kernel(xp_ref, w1_ref, b1_ref, w2_ref, b2_ref, o_ref, *,
                       H, P, KH, mm_precision):
    # xp_ref : (Bn, H+2P, W*Cin)       row-padded, lane-flattened images (mm dtype)
    # w1_ref : (KH*W*Cin,  W*Cout)     banded conv1 weights, KH taps concatenated on K
    # w2_ref : (KH*W*Cout, W*Cout)     banded conv2 weights, KH taps concatenated on K
    # b*_ref : (1, W*Cout)             biases tiled over W (f32)
    # o_ref  : (Bn, H+2P, W*Cout)      lane-dense output, P-row zero halo included
    Bn, Hp, WCin = xp_ref.shape
    WCout = w1_ref.shape[1]
    mm_dtype = xp_ref.dtype

    xp = xp_ref[...]                                               # (Bn, Hp, W*Cin)

    # ---- conv1 + tanh: one MXU dot, KH row taps folded into the contraction ----
    lhs1 = jnp.concatenate([xp[:, kh:kh + H, :] for kh in range(KH)], axis=-1)
    lhs1 = lhs1.reshape(Bn * H, KH * WCin)                         # (Bn*H, KH*W*Cin)
    a = jnp.tanh(jnp.dot(lhs1, w1_ref[...],
                         preferred_element_type=jnp.float32,
                         precision=mm_precision) + b1_ref[...])    # (Bn*H, W*Cout) f32

    # ---- conv2 + sigmoid: per-image row halo via in-register zero concat ----
    zm = jnp.zeros((Bn, P, WCout), mm_dtype)
    a_rp = jnp.concatenate([zm, a.reshape(Bn, H, WCout).astype(mm_dtype), zm],
                           axis=1)                                  # (Bn, Hp, W*Cout)
    lhs2 = jnp.concatenate([a_rp[:, kh:kh + H, :] for kh in range(KH)], axis=-1)
    lhs2 = lhs2.reshape(Bn * H, KH * WCout)                         # (Bn*H, KH*W*Cout)
    g = jax.nn.sigmoid(jnp.dot(lhs2, w2_ref[...],
                               preferred_element_type=jnp.float32,
                               precision=mm_precision) + b2_ref[...])  # f32

    # ---- gated multiply; store with the next layer's P-row zero halo in place ----
    y = (a * g).reshape(Bn, H, WCout).astype(o_ref.dtype)
    zo = jnp.zeros((Bn, P, WCout), o_ref.dtype)
    o_ref[...] = jnp.concatenate([zo, y, zo], axis=1)               # unmasked 128-lane store


# ----------------------------------------------------------------------- weight prep
def _banded_weight_cat(w, W, P):
    """(Cout, Cin, KH, KW) OIHW conv weight -> (KH*W*Cin, W*Cout) banded matrix.

    With images flattened to rows of length W*Cin and the KH row taps folded into the
    contraction (LHS = lane-concat of the KH row-shifted views), each conv becomes one
    (M, KH*W*Cin) @ (KH*W*Cin, W*Cout) matmul; the KW taps and the column 'same' zero
    padding are encoded in the band structure (out-of-range columns are 0)."""
    Cout, Cin, KH, KW = w.shape
    wt = jnp.transpose(w, (2, 3, 1, 0)).astype(jnp.float32)          # (KH, KW, Cin, Cout)
    # sel[kw][w', w] = 1 iff w' == w + kw - P  (column tap selection incl. padding)
    sel = np.stack([np.eye(W, W, k=P - kw, dtype=np.float32) for kw in range(KW)])
    big = jnp.einsum('hkic,kpw->hpiwc', wt, jnp.asarray(sel))        # (KH, W', Cin, W, Cout)
    # TODO(synk): for production widths, column-tile this band (block-diagonal output
    # tiles) instead of shipping the dense O(W^2) matrix into VMEM.
    return big.reshape(KH * W * Cin, W * Cout)


def _prep_params(w1, b1, w2, b2, W, P, mm_dtype):
    Cout = w1.shape[0]
    w1c = _banded_weight_cat(w1, W, P).astype(mm_dtype)              # (KH*W*Cin,  W*Cout)
    w2c = _banded_weight_cat(w2, W, P).astype(mm_dtype)              # (KH*W*Cout, W*Cout)
    b1t = jnp.tile(b1.astype(jnp.float32), W).reshape(1, W * Cout)   # (1, W*Cout)
    b2t = jnp.tile(b2.astype(jnp.float32), W).reshape(1, W * Cout)
    return w1c, b1t, w2c, b2t


def _choose_block_n(N, Hp, WCin, WCout, in_bytes, out_bytes):
    # Fill the MXU M dimension (a few hundred rows per step) while
    #  (a) keeping >= 2 grid steps when N >= 2 so both v7x TensorCores get work
    #      (grid axis is "parallel"), and
    #  (b) keeping the double-buffered input+output blocks well under scoped VMEM.
    bn = max(1, 256 // Hp)
    if N >= 2:
        bn = min(bn, pl.cdiv(N, 2))
    per_image = Hp * (WCin * in_bytes + WCout * out_bytes)
    bn = min(bn, max(1, (8 << 20) // max(1, 2 * per_image)))
    return int(max(1, min(bn, N)))


# ---------------------------------------------------------------- lane-dense core call
def gated_conv2d_lane_dense(xp, w1c, b1t, w2c, b2t, *, H, P, KH, out_dtype,
                            mm_precision=None, block_n=None):
    """xp: (N, H+2P, W*Cin) row-padded lane-dense input (mm dtype, e.g. bf16).
    Returns (N, H+2P, W*Cout) lane-dense output with the P-row zero halo already
    written, so stacked gated layers chain with no per-layer pads/transposes."""
    N, Hp, WCin = xp.shape
    WCout = w1c.shape[1]
    assert Hp == H + 2 * P

    if block_n is None:
        block_n = _choose_block_n(N, Hp, WCin, WCout,
                                  jnp.dtype(xp.dtype).itemsize,
                                  jnp.dtype(out_dtype).itemsize)
    n_steps = pl.cdiv(N, block_n)
    Np = n_steps * block_n
    if Np != N:                                   # pad batch with zero images; dropped below
        xp = jnp.pad(xp, ((0, Np - N), (0, 0), (0, 0)))

    kernel = partial(_gated_conv_kernel, H=H, P=P, KH=KH, mm_precision=mm_precision)

    out = pl.pallas_call(
        kernel,
        out_shape=jax.ShapeDtypeStruct((Np, Hp, WCout), out_dtype),
        grid_spec=pltpu.PrefetchScalarGridSpec(
            num_scalar_prefetch=0,
            grid=(n_steps,),
            in_specs=[
                pl.BlockSpec((block_n, Hp, WCin), lambda n: (n, 0, 0)),
                pl.BlockSpec(w1c.shape, lambda n: (0, 0)),   # grid-invariant weights
                pl.BlockSpec(b1t.shape, lambda n: (0, 0)),
                pl.BlockSpec(w2c.shape, lambda n: (0, 0)),
                pl.BlockSpec(b2t.shape, lambda n: (0, 0)),
            ],
            out_specs=pl.BlockSpec((block_n, Hp, WCout), lambda n: (n, 0, 0)),
        ),
        compiler_params=pltpu.CompilerParams(
            dimension_semantics=("parallel",)),
    )(xp, w1c, b1t, w2c, b2t)

    return out[:N] if Np != N else out


# ------------------------------------------------------------------ NCHW conveniences
def gated_encoder(x_nchw, layers, *, padding=1, use_bf16_matmul=True, block_n=None):
    """Stack of GatedConv2d layers (stride=1, 'same' padding, all gated).  The NCHW
    <-> lane-dense transposes and the row-halo pad happen ONCE at entry/exit; the
    activations stay in the lane-dense row-padded layout between layers.
    # TODO(synk): MaxPool2d / stride>1 / ungated conv branches of GatedEncoder are not
    # implemented in this fused kernel."""
    N, Cin, H, W = x_nchw.shape
    P = padding
    mm_dtype = jnp.bfloat16 if use_bf16_matmul else jnp.float32
    mm_precision = None if use_bf16_matmul else jax.lax.Precision.HIGHEST

    # NCHW -> lane-dense (N, H, W*Cin) rows, cast to the matmul dtype, row halo pad —
    # fused into one entry transform for the whole stack.
    xp = jnp.pad(
        jnp.transpose(x_nchw, (0, 2, 3, 1)).reshape(N, H, W * Cin).astype(mm_dtype),
        ((0, 0), (P, P), (0, 0)))

    cout = Cin
    for li, (w1, b1, w2, b2) in enumerate(layers):
        cout, _, KH, KW = w1.shape
        assert KH == KW and 2 * P == KH - 1, "GatedConv2d requires stride=1 'same' conv"
        w1c, b1t, w2c, b2t = _prep_params(w1, b1, w2, b2, W, P, mm_dtype)
        last = li == len(layers) - 1
        xp = gated_conv2d_lane_dense(
            xp, w1c, b1t, w2c, b2t, H=H, P=P, KH=KH,
            out_dtype=x_nchw.dtype if last else mm_dtype,
            mm_precision=mm_precision, block_n=block_n)

    # lane-dense -> NCHW once at exit (drop the halo rows written by the last kernel)
    y = xp[:, P:P + H, :].reshape(N, H, W, cout)
    return jnp.transpose(y, (0, 3, 1, 2))


def gated_conv2d(x_nchw, w1, b1, w2, b2, *, padding=1, use_bf16_matmul=True, block_n=None):
    """Single GatedConv2d layer, NCHW in / NCHW out."""
    return gated_encoder(x_nchw, [(w1, b1, w2, b2)], padding=padding,
                         use_bf16_matmul=use_bf16_matmul, block_n=block_n)


# -------------------------------------------------------------------------- reference
def _reference(x, w1, b1, w2, b2, padding=1):
    dn = ('NCHW', 'OIHW', 'NCHW')
    hp = jax.lax.Precision.HIGHEST
    a = jax.lax.conv_general_dilated(x, w1, (1, 1), [(padding, padding)] * 2,
                                     dimension_numbers=dn, precision=hp)
    a = jnp.tanh(a + b1[None, :, None, None])
    g = jax.lax.conv_general_dilated(a, w2, (1, 1), [(padding, padding)] * 2,
                                     dimension_numbers=dn, precision=hp)
    g = jax.nn.sigmoid(g + b2[None, :, None, None])
    return a * g


if __name__ == "__main__":
    # Small shapes consistent with the module: N=2, Cin=4, Cout=8, 16x16 spatial, 3x3 kernel.
    N, Cin, Cout, H, W, K, P = 2, 4, 8, 16, 16, 3, 1

    key = jax.random.PRNGKey(0)
    keys = jax.random.split(key, 10)

    x = jax.random.normal(keys[0], (N, Cin, H, W), jnp.float32)
    # PyTorch Conv2d-style uniform init bounds.
    bound1 = 1.0 / np.sqrt(Cin * K * K)
    bound2 = 1.0 / np.sqrt(Cout * K * K)
    w1 = jax.random.uniform(keys[1], (Cout, Cin, K, K), jnp.float32, -bound1, bound1)
    b1 = jax.random.uniform(keys[2], (Cout,), jnp.float32, -bound1, bound1)
    w2 = jax.random.uniform(keys[3], (Cout, Cout, K, K), jnp.float32, -bound2, bound2)
    b2 = jax.random.uniform(keys[4], (Cout,), jnp.float32, -bound2, bound2)
    # Second gated layer (Cout -> Cout) for the lane-dense chaining check.
    w3 = jax.random.uniform(keys[5], (Cout, Cout, K, K), jnp.float32, -bound2, bound2)
    b3 = jax.random.uniform(keys[6], (Cout,), jnp.float32, -bound2, bound2)
    w4 = jax.random.uniform(keys[7], (Cout, Cout, K, K), jnp.float32, -bound2, bound2)
    b4 = jax.random.uniform(keys[8], (Cout,), jnp.float32, -bound2, bound2)

    ref1 = jax.block_until_ready(_reference(x, w1, b1, w2, b2, padding=P))

    # f32 + HIGHEST: tight check of the banded / KH-folded / M-batched restructuring.
    out_f32 = jax.block_until_ready(
        gated_conv2d(x, w1, b1, w2, b2, padding=P, use_bf16_matmul=False))
    assert out_f32.shape == (N, Cout, H, W), out_f32.shape
    err_f32 = float(jnp.max(jnp.abs(out_f32 - ref1)))
    assert err_f32 < 1e-4, f"f32 path max abs error {err_f32}"

    # Default fast path: bf16 MXU inputs (cast in the wrapper), f32 accumulation and
    # f32 elementwise.  Tolerance reflects bf16 input rounding (not accumulation error).
    out_bf16 = jax.block_until_ready(
        gated_conv2d(x, w1, b1, w2, b2, padding=P, use_bf16_matmul=True))
    assert out_bf16.shape == (N, Cout, H, W), out_bf16.shape
    err_bf16 = float(jnp.max(jnp.abs(out_bf16 - ref1)))
    assert err_bf16 < 5e-2, f"bf16 path max abs error {err_bf16}"

    # Larger batch: exercises block_n > 1 (several images folded into the matmul M dim,
    # 2 parallel grid steps).
    xb = jax.random.normal(keys[9], (8, Cin, H, W), jnp.float32)
    refb = _reference(xb, w1, b1, w2, b2, padding=P)
    outb = jax.block_until_ready(
        gated_conv2d(xb, w1, b1, w2, b2, padding=P, use_bf16_matmul=True))
    err_b = float(jnp.max(jnp.abs(outb - refb)))
    assert outb.shape == (8, Cout, H, W), outb.shape
    assert err_b < 5e-2, f"batched bf16 path max abs error {err_b}"

    # 2-layer gated mini-encoder staying in the lane-dense layout between layers
    # (one NCHW<->lane-dense transform at entry/exit; halo written by each kernel).
    ref2 = jax.block_until_ready(_reference(ref1, w3, b3, w4, b4, padding=P))
    out2 = jax.block_until_ready(
        gated_encoder(x, [(w1, b1, w2, b2), (w3, b3, w4, b4)], padding=P,
                      use_bf16_matmul=True))
    assert out2.shape == (N, Cout, H, W), out2.shape
    err_2 = float(jnp.max(jnp.abs(out2 - ref2)))
    assert err_2 < 5e-2, f"2-layer lane-dense chain max abs error {err_2}"

    print("KERNEL_OK")
</pallas_src>

<mosaic_0001>
module attributes {stable_mosaic.version = 11 : i64} {
  func.func @_gated_conv_kernel(%arg0: i32, %arg1: memref<1x18x64xf32, #tpu.memory_space<vmem>>, %arg2: memref<192x128xf32, #tpu.memory_space<vmem>>, %arg3: memref<1x128xf32, #tpu.memory_space<vmem>>, %arg4: memref<384x128xf32, #tpu.memory_space<vmem>>, %arg5: memref<1x128xf32, #tpu.memory_space<vmem>>, %arg6: memref<1x18x128xf32, #tpu.memory_space<vmem>>) attributes {dimension_semantics = [#tpu.dimension_semantics<parallel>], iteration_bounds = array<i64: 2>, scalar_prefetch = 0 : i64, scratch_operands = 0 : i64, tpu.core_type = #tpu.core_type<tc>, window_params = [{transform_indices = @transform_0, window_bounds = array<i64: 1, 18, 64>}, {pipeline_mode = #tpu.pipeline_mode<synchronous>, transform_indices = @transform_1, window_bounds = array<i64: 192, 128>}, {pipeline_mode = #tpu.pipeline_mode<synchronous>, transform_indices = @transform_2, window_bounds = array<i64: 1, 128>}, {pipeline_mode = #tpu.pipeline_mode<synchronous>, transform_indices = @transform_3, window_bounds = array<i64: 384, 128>}, {pipeline_mode = #tpu.pipeline_mode<synchronous>, transform_indices = @transform_4, window_bounds = array<i64: 1, 128>}, {transform_indices = @transform_5, window_bounds = array<i64: 1, 18, 128>}]} {
    %c0 = arith.constant 0 : index
    %c0_0 = arith.constant 0 : index
    %c0_1 = arith.constant 0 : index
    %0 = vector.load %arg1[%c0, %c0_0, %c0_1] : memref<1x18x64xf32, #tpu.memory_space<vmem>>, vector<1x18x64xf32>
    %1 = vector.extract_strided_slice %0 {offsets = [0, 0, 0], sizes = [1, 16, 64], strides = [1, 1, 1]} : vector<1x18x64xf32> to vector<1x16x64xf32>
    %2 = vector.extract_strided_slice %0 {offsets = [0, 1, 0], sizes = [1, 16, 64], strides = [1, 1, 1]} : vector<1x18x64xf32> to vector<1x16x64xf32>
    %3 = vector.extract_strided_slice %0 {offsets = [0, 2, 0], sizes = [1, 16, 64], strides = [1, 1, 1]} : vector<1x18x64xf32> to vector<1x16x64xf32>
    %4 = tpu.concatenate %1, %2, %3 in 2 : vector<1x16x64xf32>, vector<1x16x64xf32>, vector<1x16x64xf32> -> vector<1x16x192xf32>
    %5 = vector.shape_cast %4 : vector<1x16x192xf32> to vector<16x192xf32>
    %c0_2 = arith.constant 0 : index
    %c0_3 = arith.constant 0 : index
    %6 = vector.load %arg2[%c0_2, %c0_3] : memref<192x128xf32, #tpu.memory_space<vmem>>, vector<192x128xf32>
    %cst = arith.constant dense<0.000000e+00> : vector<16x128xf32>
    %7 = tpu.matmul %5, %6, %cst {dimension_numbers = #tpu.dot_dimension_numbers<[1], [0], [0], [1], [0, 0, 1, 1], [], []>, precision = #tpu.contract_precision<fp32>} : vector<16x192xf32>, vector<192x128xf32>, vector<16x128xf32> -> vector<16x128xf32>
    %c0_4 = arith.constant 0 : index
    %c0_5 = arith.constant 0 : index
    %8 = vector.load %arg3[%c0_4, %c0_5] : memref<1x128xf32, #tpu.memory_space<vmem>>, vector<1x128xf32>
    %9 = vector.broadcast %8 : vector<1x128xf32> to vector<16x128xf32>
    %10 = arith.addf %7, %9 : vector<16x128xf32>
    %11 = math.tanh %10 : vector<16x128xf32>
    %cst_6 = arith.constant 0.000000e+00 : f32
    %12 = vector.broadcast %cst_6 : f32 to vector<1x1x128xf32>
    %13 = vector.shape_cast %11 : vector<16x128xf32> to vector<1x16x128xf32>
    %14 = tpu.concatenate %12, %13, %12 in 1 : vector<1x1x128xf32>, vector<1x16x128xf32>, vector<1x1x128xf32> -> vector<1x18x128xf32>
    %15 = vector.extract_strided_slice %14 {offsets = [0, 0, 0], sizes = [1, 16, 128], strides = [1, 1, 1]} : vector<1x18x128xf32> to vector<1x16x128xf32>
    %16 = vector.extract_strided_slice %14 {offsets = [0, 1, 0], sizes = [1, 16, 128], strides = [1, 1, 1]} : vector<1x18x128xf32> to vector<1x16x128xf32>
    %17 = vector.extract_strided_slice %14 {offsets = [0, 2, 0], sizes = [1, 16, 128], strides = [1, 1, 1]} : vector<1x18x128xf32> to vector<1x16x128xf32>
    %18 = tpu.concatenate %15, %16, %17 in 2 : vector<1x16x128xf32>, vector<1x16x128xf32>, vector<1x16x128xf32> -> vector<1x16x384xf32>
    %19 = vector.shape_cast %18 : vector<1x16x384xf32> to vector<16x384xf32>
    %c0_7 = arith.constant 0 : index
    %c0_8 = arith.constant 0 : index
    %20 = vector.load %arg4[%c0_7, %c0_8] : memref<384x128xf32, #tpu.memory_space<vmem>>, vector<384x128xf32>
    %cst_9 = arith.constant dense<0.000000e+00> : vector<16x128xf32>
    %21 = tpu.matmul %19, %20, %cst_9 {dimension_numbers = #tpu.dot_dimension_numbers<[1], [0], [0], [1], [0, 0, 1, 1], [], []>, precision = #tpu.contract_precision<fp32>} : vector<16x384xf32>, vector<384x128xf32>, vector<16x128xf32> -> vector<16x128xf32>
    %c0_10 = arith.constant 0 : index
    %c0_11 = arith.constant 0 : index
    %22 = vector.load %arg5[%c0_10, %c0_11] : memref<1x128xf32, #tpu.memory_space<vmem>>, vector<1x128xf32>
    %23 = vector.broadcast %22 : vector<1x128xf32> to vector<16x128xf32>
    %24 = arith.addf %21, %23 : vector<16x128xf32>
    %25 = arith.negf %24 : vector<16x128xf32>
    %26 = math.exp %25 : vector<16x128xf32>
    %cst_12 = arith.constant 1.000000e+00 : f32
    %27 = vector.broadcast %cst_12 : f32 to vector<16x128xf32>
    %28 = arith.addf %27, %26 : vector<16x128xf32>
    %29 = arith.divf %27, %28 : vector<16x128xf32>
    %30 = arith.mulf %11, %29 : vector<16x128xf32>
    %31 = vector.shape_cast %30 : vector<16x128xf32> to vector<1x16x128xf32>
    %cst_13 = arith.constant 0.000000e+00 : f32
    %32 = vector.broadcast %cst_13 : f32 to vector<1x1x128xf32>
    %33 = tpu.concatenate %32, %31, %32 in 1 : vector<1x1x128xf32>, vector<1x16x128xf32>, vector<1x1x128xf32> -> vector<1x18x128xf32>
    %c0_14 = arith.constant 0 : index
    %c0_15 = arith.constant 0 : index
    %c0_16 = arith.constant 0 : index
    %34 = vector.load %arg6[%c0_14, %c0_15, %c0_16] : memref<1x18x128xf32, #tpu.memory_space<vmem>>, vector<1x18x128xf32>
    tpu.vector_store %arg6[%c0_14, %c0_15, %c0_16], %33 {strides = array<i32>} : memref<1x18x128xf32, #tpu.memory_space<vmem>>, vector<1x18x128xf32>,
    return
  }
  func.func @transform_0(%arg0: i32) -> (i32, i32, i32) {
    %c0_i32 = arith.constant 0 : i32
    %c0_i32_0 = arith.constant 0 : i32
    %c0_i32_1 = arith.constant 0 : i32
    return %arg0, %c0_i32, %c0_i32_0 : i32, i32, i32
  }
  func.func @transform_1(%arg0: i32) -> (i32, i32) {
    %c0_i32 = arith.constant 0 : i32
    %c0_i32_0 = arith.constant 0 : i32
    %c0_i32_1 = arith.constant 0 : i32
    return %c0_i32, %c0_i32_0 : i32, i32
  }
  func.func @transform_2(%arg0: i32) -> (i32, i32) {
    %c0_i32 = arith.constant 0 : i32
    %c0_i32_0 = arith.constant 0 : i32
    %c0_i32_1 = arith.constant 0 : i32
    return %c0_i32, %c0_i32_0 : i32, i32
  }
  func.func @transform_3(%arg0: i32) -> (i32, i32) {
    %c0_i32 = arith.constant 0 : i32
    %c0_i32_0 = arith.constant 0 : i32
    %c0_i32_1 = arith.constant 0 : i32
    return %c0_i32, %c0_i32_0 : i32, i32
  }
  func.func @transform_4(%arg0: i32) -> (i32, i32) {
    %c0_i32 = arith.constant 0 : i32
    %c0_i32_0 = arith.constant 0 : i32
    %c0_i32_1 = arith.constant 0 : i32
    return %c0_i32, %c0_i32_0 : i32, i32
  }
  func.func @transform_5(%arg0: i32) -> (i32, i32, i32) {
    %c0_i32 = arith.constant 0 : i32
    %c0_i32_0 = arith.constant 0 : i32
    %c0_i32_1 = arith.constant 0 : i32
    return %arg0, %c0_i32, %c0_i32_0 : i32, i32, i32
  }
}

</mosaic_0001>

<llo_original>
// kernel: tpu_custom_call.1
$region0: #{tpu_custom_call.1}
  #allocation0 [shape = 'u32[]', space=smem, size = 0x4, offset = 0x4, fixed_abs, tag = 'smem constant byte address 0x4 - core index']
  #allocation1 [shape = 'u32[72,128]{1,0:T(1,128)}', space=vmem, size = 0x9000, scoped, tag = 'internal scratch']
  %s0 = inlined_call_operand.vmem [shape: f32[2,18,64], index: 0, kind: input, shape index: {}]
  %s1 = inlined_call_operand.hbm [shape: f32[192,128], index: 1, kind: input, shape index: {}]
  %s2 = inlined_call_operand.vmem [shape: f32[1,128], index: 2, kind: input, shape index: {}]
  %s3 = inlined_call_operand.hbm [shape: f32[384,128], index: 3, kind: input, shape index: {}]
  %s4 = inlined_call_operand.vmem [shape: f32[1,128], index: 4, kind: input, shape index: {}]
  %s5 = inlined_call_operand.vmem [shape: f32[2,18,128], index: 5, kind: output, shape index: {}]
  %s6 = sld [smem:[#allocation0]]
  $region61: #{tpu_custom_call.1} parent=0
    _
  %s8 = ssub.s32 1, %s6
  %s9 = scalar_select 0, %s8, %s6
  $region1: #{tpu_custom_call.1} parent=0
    #allocation2 [shape = 'u8[98304]{0}', space=vmem, size = 0x18000, scoped, tag = 'input window, operand 1, single buffered']
    #allocation3 [shape = 's32[2]{0}', space=sflag, size = 0x8, scoped, tag = 'scoped memory for tpu_custom_call.1']
    #allocation4 [shape = 'u8[196608]{0}', space=vmem, size = 0x30000, scoped, tag = 'input window, operand 3, single buffered']
    #allocation5 [shape = 's32[1]{0}', space=sflag, size = 0x4, scoped, tag = 'scoped memory for tpu_custom_call.1']
    %10 = vsyncpa [#allocation3], 0
    %11 = vsyncpa [#allocation5], 0
    loop: start=0, step=1, limit=4
    $region2: #{tpu_custom_call.1} parent=1 // loop_pre_header
      _
    $region3: #{tpu_custom_call.1} parent=1 // loop_header
      %s13 = sphi 0, %s17
      %p14 = scmp.ge.s32.totalorder %s13, 4
      %s23 = sphi 0, %s25
      %s26 = sphi 0, %s23
      %s27 = sphi 0, %s26
      %s43 = sphi 0, %s27
      %s47 = sphi 0, %s47
      %s49 = sphi 0, %s47
      %s50 = sphi 0, %s49
      %s64 = sphi 0, %s50
      %s68 = sphi 0, %s68
      %s70 = sphi 0, %s68
      %s71 = sphi 0, %s70
      %s85 = sphi 0, %s71
      %s89 = sphi 0, %s89
      %s91 = sphi 0, %s89
      %s92 = sphi 0, %s91
      %s106 = sphi 0, %s92
      %s110 = sphi 0, %s110
      %s112 = sphi 0, %s110
      %s113 = sphi 0, %s112
      %s127 = sphi 0, %s113
      %s133 = sphi 0, %s135
      %s136 = sphi 0, %s133
      %s137 = sphi 0, %s136
      %s153 = sphi 0, %s137
    $region4: #{tpu_custom_call.1} parent=1 // loop_header_branch
      %16 = sbr.rel (%p14) target = $region8
    $region5: #{tpu_custom_call.1} parent=1 // loop_body
      %s18 = ssub.s32 %s13, 1
      %s19 = ssub.s32 %s13, 2
      %s20 = sadd.s32 %s13, 1
      %s21 = ssub.s32 %s13, %s20
      %p22 = scmp.eq.s32.totalorder %s21, 0
      %s24 = sadd.s32 %s23, 1
      %s25 = scalar_select %p22, %s23, %s24
      %p28 = pneg %p22
      %p29 = scmp.eq.s32.totalorder %s13, 1
      %p30 = por %p28, %p29
      %p31 = scmp.ne.s32.totalorder %s23, %s26
      %p32 = scmp.eq.s32.totalorder %s13, 0
      %p33 = por %p31, %p32
      %p34 = scmp.ne.s32.totalorder %s23, %s26
      %p35 = scmp.eq.s32.totalorder %s18, 1
      %p36 = por %p34, %p35
      %p37 = scmp.ne.s32.totalorder %s26, %s27
      %p38 = scmp.eq.s32.totalorder %s18, 0
      %p39 = por %p37, %p38
      %p40 = scmp.ne.s32.totalorder %s26, %s27
      %p41 = scmp.eq.s32.totalorder %s19, 1
      %p42 = por %p40, %p41
      %p44 = scmp.ne.s32.totalorder %s27, %s43
      %p45 = scmp.eq.s32.totalorder %s19, 0
      %p46 = por %p44, %p45
      %s48 = sadd.s32 %s47, 1
      %p51 = scmp.eq.s32.totalorder %s13, 1
      %p52 = scmp.ne.s32.totalorder %s47, %s49
      %p53 = scmp.eq.s32.totalorder %s13, 0
      %p54 = por %p52, %p53
      %p55 = scmp.ne.s32.totalorder %s47, %s49
      %p56 = scmp.eq.s32.totalorder %s18, 1
      %p57 = por %p55, %p56
      %p58 = scmp.ne.s32.totalorder %s49, %s50
      %p59 = scmp.eq.s32.totalorder %s18, 0
      %p60 = por %p58, %p59
      %p61 = scmp.ne.s32.totalorder %s49, %s50
      %p62 = scmp.eq.s32.totalorder %s19, 1
      %p63 = por %p61, %p62
      %p65 = scmp.ne.s32.totalorder %s50, %s64
      %p66 = scmp.eq.s32.totalorder %s19, 0
      %p67 = por %p65, %p66
      %s69 = sadd.s32 %s68, 1
      %p72 = scmp.eq.s32.totalorder %s13, 1
      %p73 = scmp.ne.s32.totalorder %s68, %s70
      %p74 = scmp.eq.s32.totalorder %s13, 0
      %p75 = por %p73, %p74
      %p76 = scmp.ne.s32.totalorder %s68, %s70
      %p77 = scmp.eq.s32.totalorder %s18, 1
      %p78 = por %p76, %p77
      %p79 = scmp.ne.s32.totalorder %s70, %s71
      %p80 = scmp.eq.s32.totalorder %s18, 0
      %p81 = por %p79, %p80
      %p82 = scmp.ne.s32.totalorder %s70, %s71
      %p83 = scmp.eq.s32.totalorder %s19, 1
      %p84 = por %p82, %p83
      %p86 = scmp.ne.s32.totalorder %s71, %s85
      %p87 = scmp.eq.s32.totalorder %s19, 0
      %p88 = por %p86, %p87
      %s90 = sadd.s32 %s89, 1
      %p93 = scmp.eq.s32.totalorder %s13, 1
      %p94 = scmp.ne.s32.totalorder %s89, %s91
      %p95 = scmp.eq.s32.totalorder %s13, 0
      %p96 = por %p94, %p95
      %p97 = scmp.ne.s32.totalorder %s89, %s91
      %p98 = scmp.eq.s32.totalorder %s18, 1
      %p99 = por %p97, %p98
      %p100 = scmp.ne.s32.totalorder %s91, %s92
      %p101 = scmp.eq.s32.totalorder %s18, 0
      %p102 = por %p100, %p101
      %p103 = scmp.ne.s32.totalorder %s91, %s92
      %p104 = scmp.eq.s32.totalorder %s19, 1
      %p105 = por %p103, %p104
      %p107 = scmp.ne.s32.totalorder %s92, %s106
      %p108 = scmp.eq.s32.totalorder %s19, 0
      %p109 = por %p107, %p108
      %s111 = sadd.s32 %s110, 1
      %p114 = scmp.eq.s32.totalorder %s13, 1
      %p115 = scmp.ne.s32.totalorder %s110, %s112
      %p116 = scmp.eq.s32.totalorder %s13, 0
      %p117 = por %p115, %p116
      %p118 = scmp.ne.s32.totalorder %s110, %s112
      %p119 = scmp.eq.s32.totalorder %s18, 1
      %p120 = por %p118, %p119
      %p121 = scmp.ne.s32.totalorder %s112, %s113
      %p122 = scmp.eq.s32.totalorder %s18, 0
      %p123 = por %p121, %p122
      %p124 = scmp.ne.s32.totalorder %s112, %s113
      %p125 = scmp.eq.s32.totalorder %s19, 1
      %p126 = por %p124, %p125
      %p128 = scmp.ne.s32.totalorder %s113, %s127
      %p129 = scmp.eq.s32.totalorder %s19, 0
      %p130 = por %p128, %p129
      %s131 = ssub.s32 %s13, %s20
      %p132 = scmp.eq.s32.totalorder %s131, 0
      %s134 = sadd.s32 %s133, 1
      %s135 = scalar_select %p132, %s133, %s134
      %p138 = pneg %p132
      %p139 = scmp.eq.s32.totalorder %s13, 1
      %p140 = por %p138, %p139
      %p141 = scmp.ne.s32.totalorder %s133, %s136
      %p142 = scmp.eq.s32.totalorder %s13, 0
      %p143 = por %p141, %p142
      %p144 = scmp.ne.s32.totalorder %s133, %s136
      %p145 = scmp.eq.s32.totalorder %s18, 1
      %p146 = por %p144, %p145
      %p147 = scmp.ne.s32.totalorder %s136, %s137
      %p148 = scmp.eq.s32.totalorder %s18, 0
      %p149 = por %p147, %p148
      %p150 = scmp.ne.s32.totalorder %s136, %s137
      %p151 = scmp.eq.s32.totalorder %s19, 1
      %p152 = por %p150, %p151
      %p154 = scmp.ne.s32.totalorder %s137, %s153
      %p155 = scmp.eq.s32.totalorder %s19, 0
      %p156 = por %p154, %p155
      %p157 = scmp.le.s32.totalorder 1, %s13
      %p158 = scmp.lt.s32.totalorder %s13, 3
      %p159 = pnand %p157, %p158
      %p160 = pneg %p159
      // Predicated region
      $region9: #{tpu_custom_call.1} parent=5 // pred_check
        _
      $region10: #{tpu_custom_call.1} parent=5 // pred_check_branch
        %162 = sbr.rel (%p159) target = $region12
      $region11: #{tpu_custom_call.1} parent=5 // pred_region
        %s163 = ssub.s32 %s13, 1
        // Predicated region
        $region13: #{tpu_custom_call.1} parent=11 // pred_check
          %p164 = pneg %p60
        $region14: #{tpu_custom_call.1} parent=11 // pred_check_branch
          %166 = sbr.rel (%p164) target = $region16
        $region15: #{tpu_custom_call.1} parent=11 // pred_region
          %168 = vsyncadd [#allocation3], 0
          %s169 = sshll.u32 %s1, 4
          %s170 = int_to_ptr.hbm [resolvable:$true] %s169
          %s171 = sshll.u32 [#allocation2], 4
          %s172 = int_to_ptr.vmem [resolvable:$true] %s171
          %177 = dma.hbm_to_vmem [thread:$0]  %s170, 3072, %s172, [#allocation3], 128, 128, 8
        $region16: #{tpu_custom_call.1} parent=11 // pred_fallthru
          _
        // Predicated region
        $region17: #{tpu_custom_call.1} parent=11 // pred_check
          %p178 = pneg %p81
        $region18: #{tpu_custom_call.1} parent=11 // pred_check_branch
          %180 = sbr.rel (%p178) target = $region20
        $region19: #{tpu_custom_call.1} parent=11 // pred_region
          _
        $region20: #{tpu_custom_call.1} parent=11 // pred_fallthru
          _
        // Predicated region
        $region21: #{tpu_custom_call.1} parent=11 // pred_check
          %p181 = pneg %p102
        $region22: #{tpu_custom_call.1} parent=11 // pred_check_branch
          %183 = sbr.rel (%p181) target = $region24
        $region23: #{tpu_custom_call.1} parent=11 // pred_region
          %185 = vsyncadd [#allocation5], 0
          %s186 = sshll.u32 %s3, 4
          %s187 = int_to_ptr.hbm [resolvable:$true] %s186
          %s188 = sshll.u32 [#allocation4], 4
          %s189 = int_to_ptr.vmem [resolvable:$true] %s188
          %194 = dma.hbm_to_vmem [thread:$0]  %s187, 6144, %s189, [#allocation5], 128, 128, 8
        $region24: #{tpu_custom_call.1} parent=11 // pred_fallthru
          _
        // Predicated region
        $region25: #{tpu_custom_call.1} parent=11 // pred_check
          %p195 = pneg %p123
        $region26: #{tpu_custom_call.1} parent=11 // pred_check_branch
          %197 = sbr.rel (%p195) target = $region28
        $region27: #{tpu_custom_call.1} parent=11 // pred_region
          _
        $region28: #{tpu_custom_call.1} parent=11 // pred_fallthru
          _
      $region12: #{tpu_custom_call.1} parent=5 // pred_fallthru
        _
      %p198 = scmp.lt.s32.totalorder %s13, 2
      // Predicated region
      $region29: #{tpu_custom_call.1} parent=5 // pred_check
        %p199 = pneg %p198
      $region30: #{tpu_custom_call.1} parent=5 // pred_check_branch
        %201 = sbr.rel (%p199) target = $region32
      $region31: #{tpu_custom_call.1} parent=5 // pred_region
        // Predicated region
        $region33: #{tpu_custom_call.1} parent=31 // pred_check
          %p202 = pneg %p33
        $region34: #{tpu_custom_call.1} parent=31 // pred_check_branch
          %204 = sbr.rel (%p202) target = $region36
        $region35: #{tpu_custom_call.1} parent=31 // pred_region
          %p205 = scmp.lt.s32.totalorder %s13, 1
          %s206 = scalar_select %p205, %s13, 1
          %s207 = smul.addr %s206, 3
          %s208 = smul.addr %s207, 8
          %s209 = scalar_lea.vmem %s0, %s208
        $region36: #{tpu_custom_call.1} parent=31 // pred_fallthru
          _
      $region32: #{tpu_custom_call.1} parent=5 // pred_fallthru
        _
      %p210 = scmp.le.s32.totalorder 1, %s13
      %p211 = scmp.lt.s32.totalorder %s13, 3
      %p212 = pnand %p210, %p211
      %p213 = pneg %p212
      // Predicated region
      $region37: #{tpu_custom_call.1} parent=5 // pred_check
        _
      $region38: #{tpu_custom_call.1} parent=5 // pred_check_branch
        %215 = sbr.rel (%p212) target = $region40
      $region39: #{tpu_custom_call.1} parent=5 // pred_region
        %s216 = ssub.s32 %s13, 1
        // Predicated region
        $region41: #{tpu_custom_call.1} parent=39 // pred_check
          %p217 = pneg %p60
        $region42: #{tpu_custom_call.1} parent=39 // pred_check_branch
          %219 = sbr.rel (%p217) target = $region44
        $region43: #{tpu_custom_call.1} parent=39 // pred_region
          %221 = dma.done [#allocation3], 3072
        $region44: #{tpu_custom_call.1} parent=39 // pred_fallthru
          _
        // Predicated region
        $region45: #{tpu_custom_call.1} parent=39 // pred_check
          %p222 = pneg %p102
        $region46: #{tpu_custom_call.1} parent=39 // pred_check_branch
          %224 = sbr.rel (%p222) target = $region48
        $region47: #{tpu_custom_call.1} parent=39 // pred_region
          %226 = dma.done [#allocation5], 6144
        $region48: #{tpu_custom_call.1} parent=39 // pred_fallthru
          _
        %p227 = scmp.lt.s32.totalorder %s18, 1
        %s228 = scalar_select %p227, %s18, 1
        %s229 = smul.addr %s228, 3
        %s230 = smul.addr %s229, 8
        %s231 = scalar_lea.vmem %s0, %s230
        %p232 = pneg %p39
        %p233 = pneg %p36
        %p234 = pneg %p60
        %p235 = pneg %p57
        %p236 = pneg %p81
        %p237 = pneg %p78
        %p238 = pneg %p102
        %p239 = pneg %p99
        %p240 = pneg %p123
        %p241 = pneg %p120
        %p242 = pneg %p149
        %p243 = pneg %p146
        %p244 = scmp.lt.s32.totalorder %s18, 1
        %s245 = scalar_select %p244, %s18, 1
        %s246 = smul.addr %s245, 3
        %s247 = smul.addr %s246, 8
        %s248 = scalar_lea.vmem %s5, %s247
        %p249 = scmp.lt.s32.totalorder %s18, 1
        %s250 = scalar_select %p249, %s18, 1
        %s251 = smul.addr %s250, 3
        %s252 = smul.addr %s251, 8
        %s253 = scalar_lea.vmem %s0, %s252
        %p254 = scmp.lt.s32.totalorder %s18, 1
        %s255 = scalar_select %p254, %s18, 1
        %s256 = smul.addr %s255, 3
        %s257 = smul.addr %s256, 8
        %s258 = scalar_lea.vmem %s5, %s257
        %v259 = vld [vmem:[%s253] sm:$0xff]
        %v260 = vld [vmem:[%s253 + $0x8] sm:$0xff]
        %v261 = vld [vmem:[%s253 + $0x10] sm:$0x3]
        %vm265 = vcmask 1046528
        %v266 = vrot.slane %v259, 1
        %v267 = vrot.slane %v260, 1
        %v268 = vsel %vm265, %v266, %v267
        %v269 = vrot.slane %v261, 1
        %v270 = vsel %vm265, %v267, %v269
        %271 = vrot.lane.b32.xlu0 %v268, 64
        %v272 = vpop.permute.xlu0 %271
        %273 = vrot.lane.b32.xlu0 %v270, 64
        %v274 = vpop.permute.xlu0 %273
        %vm277 = vcmask 1045504
        %v278 = vrot.slane %v259, 2
        %v279 = vrot.slane %v260, 2
        %v280 = vsel %vm277, %v278, %v279
        %v281 = vrot.slane %v261, 2
        %v282 = vsel %vm277, %v279, %v281
        %vm283 = vcmask 523264
        %v284 = vsel %vm283, %v259, %v272
        %v285 = vsel %vm283, %v260, %v274
        %v286 = vld [vmem:[#allocation2] sm:$0xff]
        %v287 = vld [vmem:[#allocation2 + $0x8] sm:$0xff]
        %v288 = vld [vmem:[#allocation2 + $0x10] sm:$0xff]
        %v289 = vld [vmem:[#allocation2 + $0x18] sm:$0xff]
        %v290 = vld [vmem:[#allocation2 + $0x20] sm:$0xff]
        %v291 = vld [vmem:[#allocation2 + $0x28] sm:$0xff]
        %v292 = vld [vmem:[#allocation2 + $0x30] sm:$0xff]
        %v293 = vld [vmem:[#allocation2 + $0x38] sm:$0xff]
        %v294 = vld [vmem:[#allocation2 + $0x40] sm:$0xff]
        %v295 = vld [vmem:[#allocation2 + $0x48] sm:$0xff]
        %v296 = vld [vmem:[#allocation2 + $0x50] sm:$0xff]
        %v297 = vld [vmem:[#allocation2 + $0x58] sm:$0xff]
        %v298 = vld [vmem:[#allocation2 + $0x60] sm:$0xff]
        %v299 = vld [vmem:[#allocation2 + $0x68] sm:$0xff]
        %v300 = vld [vmem:[#allocation2 + $0x70] sm:$0xff]
        %v301 = vld [vmem:[#allocation2 + $0x78] sm:$0xff]
        %v302 = vld [vmem:[#allocation2 + $0x80] sm:$0xff]
        %v303 = vld [vmem:[#allocation2 + $0x88] sm:$0xff]
        %v304 = vld [vmem:[#allocation2 + $0x90] sm:$0xff]
        %v305 = vld [vmem:[#allocation2 + $0x98] sm:$0xff]
        %v306 = vld [vmem:[#allocation2 + $0xa0] sm:$0xff]
        %v307 = vld [vmem:[#allocation2 + $0xa8] sm:$0xff]
        %v308 = vld [vmem:[#allocation2 + $0xb0] sm:$0xff]
        %v309 = vld [vmem:[#allocation2 + $0xb8] sm:$0xff]
        %v310 = vld [vmem:[%s2] sm:$0x1]
        %v312 = vperm.slane %v310, 0
        %v314 = vsel %vm283, %v280, 0
        %v316 = vsel %vm283, %v282, 0
        %v318 = vand.u32 %v301, 4294901760
        %319 = vmatpush.msra.mxu0 %v318
        %v320 = vand.u32 %v300, 4294901760
        %321 = vmatpush.msra.mxu0 %v320
        %v322 = vand.u32 %v299, 4294901760
        %323 = vmatpush.msra.mxu0 %v322
        %v324 = vand.u32 %v298, 4294901760
        %325 = vmatpush.msra.mxu0 %v324
        %v326 = vand.u32 %v297, 4294901760
        %327 = vmatpush.msra.mxu0 %v326
        %v328 = vand.u32 %v296, 4294901760
        %329 = vmatpush.msra.mxu0 %v328
        %v330 = vand.u32 %v295, 4294901760
        %331 = vmatpush.msra.mxu0 %v330
        %v332 = vand.u32 %v294, 4294901760
        %333 = vmatpush.msra.mxu0 %v332
        %v334 = vand.u32 %v293, 4294901760
        %335 = vmatpush.msra.mxu0 %v334
        %v336 = vand.u32 %v292, 4294901760
        %337 = vmatpush.msra.mxu0 %v336
        %v338 = vand.u32 %v291, 4294901760
        %339 = vmatpush.msra.mxu0 %v338
        %v340 = vand.u32 %v290, 4294901760
        %341 = vmatpush.msra.mxu0 %v340
        %v342 = vand.u32 %v289, 4294901760
        %343 = vmatpush.msra.mxu0 %v342
        %v344 = vand.u32 %v288, 4294901760
        %345 = vmatpush.msra.mxu0 %v344
        %v346 = vand.u32 %v287, 4294901760
        %347 = vmatpush.msra.mxu0 %v346
        %v348 = vand.u32 %v286, 4294901760
        %349 = vmatpush.msra.mxu0 %v348
        %v350 = vand.u32 %v284, 4294901760
        %v351 = vsub.f32 %v284, %v350
        %v352 = vand.u32 %v351, 4294901760
        %v353 = vsub.f32 %v351, %v352
        %v354 = vand.u32 %v353, 4294901760
        %355 = vmatmul.f32.gmra.mxu0 %v354
        %v356 = vpop.f32.mrf.mxu0
        %v357 = vadd.f32 %v312, %v356
        %v358 = vand.u32 %v285, 4294901760
        %v359 = vsub.f32 %v285, %v358
        %v360 = vand.u32 %v359, 4294901760
        %v361 = vsub.f32 %v359, %v360
        %v362 = vand.u32 %v361, 4294901760
        %363 = vmatmul.f32.gmra.mxu0 %v362
        %v364 = vpop.f32.mrf.mxu0
        %v365 = vadd.f32 %v312, %v364
        %366 = vdwg.mxu0
        %v367 = vand.u32 %v301, 4294901760
        %v368 = vsub.f32 %v301, %v367
        %v369 = vand.u32 %v368, 4294901760
        %v370 = vsub.f32 %v368, %v369
        %v371 = vand.u32 %v370, 4294901760
        %372 = vmatpush.msra.mxu0 %v371
        %v373 = vand.u32 %v300, 4294901760
        %v374 = vsub.f32 %v300, %v373
        %v375 = vand.u32 %v374, 4294901760
        %v376 = vsub.f32 %v374, %v375
        %v377 = vand.u32 %v376, 4294901760
        %378 = vmatpush.msra.mxu0 %v377
        %v379 = vand.u32 %v299, 4294901760
        %v380 = vsub.f32 %v299, %v379
        %v381 = vand.u32 %v380, 4294901760
        %v382 = vsub.f32 %v380, %v381
        %v383 = vand.u32 %v382, 4294901760
        %384 = vmatpush.msra.mxu0 %v383
        %v385 = vand.u32 %v298, 4294901760
        %v386 = vsub.f32 %v298, %v385
        %v387 = vand.u32 %v386, 4294901760
        %v388 = vsub.f32 %v386, %v387
        %v389 = vand.u32 %v388, 4294901760
        %390 = vmatpush.msra.mxu0 %v389
        %v391 = vand.u32 %v297, 4294901760
        %v392 = vsub.f32 %v297, %v391
        %v393 = vand.u32 %v392, 4294901760
        %v394 = vsub.f32 %v392, %v393
        %v395 = vand.u32 %v394, 4294901760
        %396 = vmatpush.msra.mxu0 %v395
        %v397 = vand.u32 %v296, 4294901760
        %v398 = vsub.f32 %v296, %v397
        %v399 = vand.u32 %v398, 4294901760
        %v400 = vsub.f32 %v398, %v399
        %v401 = vand.u32 %v400, 4294901760
        %402 = vmatpush.msra.mxu0 %v401
        %v403 = vand.u32 %v295, 4294901760
        %v404 = vsub.f32 %v295, %v403
        %v405 = vand.u32 %v404, 4294901760
        %v406 = vsub.f32 %v404, %v405
        %v407 = vand.u32 %v406, 4294901760
        %408 = vmatpush.msra.mxu0 %v407
        %v409 = vand.u32 %v294, 4294901760
        %v410 = vsub.f32 %v294, %v409
        %v411 = vand.u32 %v410, 4294901760
        %v412 = vsub.f32 %v410, %v411
        %v413 = vand.u32 %v412, 4294901760
        %414 = vmatpush.msra.mxu0 %v413
        %v415 = vand.u32 %v293, 4294901760
        %v416 = vsub.f32 %v293, %v415
        %v417 = vand.u32 %v416, 4294901760
        %v418 = vsub.f32 %v416, %v417
        %v419 = vand.u32 %v418, 4294901760
        %420 = vmatpush.msra.mxu0 %v419
        %v421 = vand.u32 %v292, 4294901760
        %v422 = vsub.f32 %v292, %v421
        %v423 = vand.u32 %v422, 4294901760
        %v424 = vsub.f32 %v422, %v423
        %v425 = vand.u32 %v424, 4294901760
        %426 = vmatpush.msra.mxu0 %v425
        %v427 = vand.u32 %v291, 4294901760
        %v428 = vsub.f32 %v291, %v427
        %v429 = vand.u32 %v428, 4294901760
        %v430 = vsub.f32 %v428, %v429
        %v431 = vand.u32 %v430, 4294901760
        %432 = vmatpush.msra.mxu0 %v431
        %v433 = vand.u32 %v290, 4294901760
        %v434 = vsub.f32 %v290, %v433
        %v435 = vand.u32 %v434, 4294901760
        %v436 = vsub.f32 %v434, %v435
        %v437 = vand.u32 %v436, 4294901760
        %438 = vmatpush.msra.mxu0 %v437
        %v439 = vand.u32 %v289, 4294901760
        %v440 = vsub.f32 %v289, %v439
        %v441 = vand.u32 %v440, 4294901760
        %v442 = vsub.f32 %v440, %v441
        %v443 = vand.u32 %v442, 4294901760
        %444 = vmatpush.msra.mxu0 %v443
        %v445 = vand.u32 %v288, 4294901760
        %v446 = vsub.f32 %v288, %v445
        %v447 = vand.u32 %v446, 4294901760
        %v448 = vsub.f32 %v446, %v447
        %v449 = vand.u32 %v448, 4294901760
        %450 = vmatpush.msra.mxu0 %v449
        %v451 = vand.u32 %v287, 4294901760
        %v452 = vsub.f32 %v287, %v451
        %v453 = vand.u32 %v452, 4294901760
        %v454 = vsub.f32 %v452, %v453
        %v455 = vand.u32 %v454, 4294901760
        %456 = vmatpush.msra.mxu0 %v455
        %v457 = vand.u32 %v286, 4294901760
        %v458 = vsub.f32 %v286, %v457
        %v459 = vand.u32 %v458, 4294901760
        %v460 = vsub.f32 %v458, %v459
        %v461 = vand.u32 %v460, 4294901760
        %462 = vmatpush.msra.mxu0 %v461
        %v463 = vand.u32 %v284, 4294901760
        %464 = vmatmul.f32.gmra.mxu0 %v463
        %v465 = vpop.f32.mrf.mxu0
        %v466 = vadd.f32 %v357, %v465
        %v467 = vand.u32 %v285, 4294901760
        %468 = vmatmul.f32.gmra.mxu0 %v467
        %v469 = vpop.f32.mrf.mxu0
        %v470 = vadd.f32 %v365, %v469
        %471 = vdwg.mxu0
        %v472 = vand.u32 %v301, 4294901760
        %v473 = vsub.f32 %v301, %v472
        %474 = vmatpush.msra.mxu0 %v473
        %v475 = vand.u32 %v300, 4294901760
        %v476 = vsub.f32 %v300, %v475
        %477 = vmatpush.msra.mxu0 %v476
        %v478 = vand.u32 %v299, 4294901760
        %v479 = vsub.f32 %v299, %v478
        %480 = vmatpush.msra.mxu0 %v479
        %v481 = vand.u32 %v298, 4294901760
        %v482 = vsub.f32 %v298, %v481
        %483 = vmatpush.msra.mxu0 %v482
        %v484 = vand.u32 %v297, 4294901760
        %v485 = vsub.f32 %v297, %v484
        %486 = vmatpush.msra.mxu0 %v485
        %v487 = vand.u32 %v296, 4294901760
        %v488 = vsub.f32 %v296, %v487
        %489 = vmatpush.msra.mxu0 %v488
        %v490 = vand.u32 %v295, 4294901760
        %v491 = vsub.f32 %v295, %v490
        %492 = vmatpush.msra.mxu0 %v491
        %v493 = vand.u32 %v294, 4294901760
        %v494 = vsub.f32 %v294, %v493
        %495 = vmatpush.msra.mxu0 %v494
        %v496 = vand.u32 %v293, 4294901760
        %v497 = vsub.f32 %v293, %v496
        %498 = vmatpush.msra.mxu0 %v497
        %v499 = vand.u32 %v292, 4294901760
        %v500 = vsub.f32 %v292, %v499
        %501 = vmatpush.msra.mxu0 %v500
        %v502 = vand.u32 %v291, 4294901760
        %v503 = vsub.f32 %v291, %v502
        %504 = vmatpush.msra.mxu0 %v503
        %v505 = vand.u32 %v290, 4294901760
        %v506 = vsub.f32 %v290, %v505
        %507 = vmatpush.msra.mxu0 %v506
        %v508 = vand.u32 %v289, 4294901760
        %v509 = vsub.f32 %v289, %v508
        %510 = vmatpush.msra.mxu0 %v509
        %v511 = vand.u32 %v288, 4294901760
        %v512 = vsub.f32 %v288, %v511
        %513 = vmatpush.msra.mxu0 %v512
        %v514 = vand.u32 %v287, 4294901760
        %v515 = vsub.f32 %v287, %v514
        %516 = vmatpush.msra.mxu0 %v515
        %v517 = vand.u32 %v286, 4294901760
        %v518 = vsub.f32 %v286, %v517
        %519 = vmatpush.msra.mxu0 %v518
        %v520 = vand.u32 %v284, 4294901760
        %v521 = vsub.f32 %v284, %v520
        %522 = vmatmul.f32.gmra.mxu0 %v521
        %v523 = vpop.f32.mrf.mxu0
        %v524 = vadd.f32 %v466, %v523
        %v525 = vand.u32 %v285, 4294901760
        %v526 = vsub.f32 %v285, %v525
        %527 = vmatmul.f32.gmra.mxu0 %v526
        %v528 = vpop.f32.mrf.mxu0
        %v529 = vadd.f32 %v470, %v528
        %530 = vdwg.mxu0
        %v531 = vand.u32 %v301, 4294901760
        %532 = vmatpush.msra.mxu0 %v531
        %v533 = vand.u32 %v300, 4294901760
        %534 = vmatpush.msra.mxu0 %v533
        %v535 = vand.u32 %v299, 4294901760
        %536 = vmatpush.msra.mxu0 %v535
        %v537 = vand.u32 %v298, 4294901760
        %538 = vmatpush.msra.mxu0 %v537
        %v539 = vand.u32 %v297, 4294901760
        %540 = vmatpush.msra.mxu0 %v539
        %v541 = vand.u32 %v296, 4294901760
        %542 = vmatpush.msra.mxu0 %v541
        %v543 = vand.u32 %v295, 4294901760
        %544 = vmatpush.msra.mxu0 %v543
        %v545 = vand.u32 %v294, 4294901760
        %546 = vmatpush.msra.mxu0 %v545
        %v547 = vand.u32 %v293, 4294901760
        %548 = vmatpush.msra.mxu0 %v547
        %v549 = vand.u32 %v292, 4294901760
        %550 = vmatpush.msra.mxu0 %v549
        %v551 = vand.u32 %v291, 4294901760
        %552 = vmatpush.msra.mxu0 %v551
        %v553 = vand.u32 %v290, 4294901760
        %554 = vmatpush.msra.mxu0 %v553
        %v555 = vand.u32 %v289, 4294901760
        %556 = vmatpush.msra.mxu0 %v555
        %v557 = vand.u32 %v288, 4294901760
        %558 = vmatpush.msra.mxu0 %v557
        %v559 = vand.u32 %v287, 4294901760
        %560 = vmatpush.msra.mxu0 %v559
        %v561 = vand.u32 %v286, 4294901760
        %562 = vmatpush.msra.mxu0 %v561
        %v563 = vand.u32 %v284, 4294901760
        %v564 = vsub.f32 %v284, %v563
        %v565 = vand.u32 %v564, 4294901760
        %566 = vmatmul.f32.gmra.mxu0 %v565
        %v567 = vpop.f32.mrf.mxu0
        %v568 = vadd.f32 %v524, %v567
        %v569 = vand.u32 %v285, 4294901760
        %v570 = vsub.f32 %v285, %v569
        %v571 = vand.u32 %v570, 4294901760
        %572 = vmatmul.f32.gmra.mxu0 %v571
        %v573 = vpop.f32.mrf.mxu0
        %v574 = vadd.f32 %v529, %v573
        %575 = vdwg.mxu0
        %v576 = vand.u32 %v301, 4294901760
        %v577 = vsub.f32 %v301, %v576
        %v578 = vand.u32 %v577, 4294901760
        %579 = vmatpush.msra.mxu0 %v578
        %v580 = vand.u32 %v300, 4294901760
        %v581 = vsub.f32 %v300, %v580
        %v582 = vand.u32 %v581, 4294901760
        %583 = vmatpush.msra.mxu0 %v582
        %v584 = vand.u32 %v299, 4294901760
        %v585 = vsub.f32 %v299, %v584
        %v586 = vand.u32 %v585, 4294901760
        %587 = vmatpush.msra.mxu0 %v586
        %v588 = vand.u32 %v298, 4294901760
        %v589 = vsub.f32 %v298, %v588
        %v590 = vand.u32 %v589, 4294901760
        %591 = vmatpush.msra.mxu0 %v590
        %v592 = vand.u32 %v297, 4294901760
        %v593 = vsub.f32 %v297, %v592
        %v594 = vand.u32 %v593, 4294901760
        %595 = vmatpush.msra.mxu0 %v594
        %v596 = vand.u32 %v296, 4294901760
        %v597 = vsub.f32 %v296, %v596
        %v598 = vand.u32 %v597, 4294901760
        %599 = vmatpush.msra.mxu0 %v598
        %v600 = vand.u32 %v295, 4294901760
        %v601 = vsub.f32 %v295, %v600
        %v602 = vand.u32 %v601, 4294901760
        %603 = vmatpush.msra.mxu0 %v602
        %v604 = vand.u32 %v294, 4294901760
        %v605 = vsub.f32 %v294, %v604
        %v606 = vand.u32 %v605, 4294901760
        %607 = vmatpush.msra.mxu0 %v606
        %v608 = vand.u32 %v293, 4294901760
        %v609 = vsub.f32 %v293, %v608
        %v610 = vand.u32 %v609, 4294901760
        %611 = vmatpush.msra.mxu0 %v610
        %v612 = vand.u32 %v292, 4294901760
        %v613 = vsub.f32 %v292, %v612
        %v614 = vand.u32 %v613, 4294901760
        %615 = vmatpush.msra.mxu0 %v614
        %v616 = vand.u32 %v291, 4294901760
        %v617 = vsub.f32 %v291, %v616
        %v618 = vand.u32 %v617, 4294901760
        %619 = vmatpush.msra.mxu0 %v618
        %v620 = vand.u32 %v290, 4294901760
        %v621 = vsub.f32 %v290, %v620
        %v622 = vand.u32 %v621, 4294901760
        %623 = vmatpush.msra.mxu0 %v622
        %v624 = vand.u32 %v289, 4294901760
        %v625 = vsub.f32 %v289, %v624
        %v626 = vand.u32 %v625, 4294901760
        %627 = vmatpush.msra.mxu0 %v626
        %v628 = vand.u32 %v288, 4294901760
        %v629 = vsub.f32 %v288, %v628
        %v630 = vand.u32 %v629, 4294901760
        %631 = vmatpush.msra.mxu0 %v630
        %v632 = vand.u32 %v287, 4294901760
        %v633 = vsub.f32 %v287, %v632
        %v634 = vand.u32 %v633, 4294901760
        %635 = vmatpush.msra.mxu0 %v634
        %v636 = vand.u32 %v286, 4294901760
        %v637 = vsub.f32 %v286, %v636
        %v638 = vand.u32 %v637, 4294901760
        %639 = vmatpush.msra.mxu0 %v638
        %v640 = vand.u32 %v284, 4294901760
        %641 = vmatmul.f32.gmra.mxu0 %v640
        %v642 = vpop.f32.mrf.mxu0
        %v643 = vadd.f32 %v568, %v642
        %v644 = vand.u32 %v285, 4294901760
        %645 = vmatmul.f32.gmra.mxu0 %v644
        %v646 = vpop.f32.mrf.mxu0
        %v647 = vadd.f32 %v574, %v646
        %648 = vdwg.mxu0
        %v649 = vand.u32 %v301, 4294901760
        %650 = vmatpush.msra.mxu0 %v649
        %v651 = vand.u32 %v300, 4294901760
        %652 = vmatpush.msra.mxu0 %v651
        %v653 = vand.u32 %v299, 4294901760
        %654 = vmatpush.msra.mxu0 %v653
        %v655 = vand.u32 %v298, 4294901760
        %656 = vmatpush.msra.mxu0 %v655
        %v657 = vand.u32 %v297, 4294901760
        %658 = vmatpush.msra.mxu0 %v657
        %v659 = vand.u32 %v296, 4294901760
        %660 = vmatpush.msra.mxu0 %v659
        %v661 = vand.u32 %v295, 4294901760
        %662 = vmatpush.msra.mxu0 %v661
        %v663 = vand.u32 %v294, 4294901760
        %664 = vmatpush.msra.mxu0 %v663
        %v665 = vand.u32 %v293, 4294901760
        %666 = vmatpush.msra.mxu0 %v665
        %v667 = vand.u32 %v292, 4294901760
        %668 = vmatpush.msra.mxu0 %v667
        %v669 = vand.u32 %v291, 4294901760
        %670 = vmatpush.msra.mxu0 %v669
        %v671 = vand.u32 %v290, 4294901760
        %672 = vmatpush.msra.mxu0 %v671
        %v673 = vand.u32 %v289, 4294901760
        %674 = vmatpush.msra.mxu0 %v673
        %v675 = vand.u32 %v288, 4294901760
        %676 = vmatpush.msra.mxu0 %v675
        %v677 = vand.u32 %v287, 4294901760
        %678 = vmatpush.msra.mxu0 %v677
        %v679 = vand.u32 %v286, 4294901760
        %680 = vmatpush.msra.mxu0 %v679
        %v681 = vand.u32 %v284, 4294901760
        %682 = vmatmul.f32.gmra.mxu0 %v681
        %v683 = vpop.f32.mrf.mxu0
        %v684 = vadd.f32 %v643, %v683
        %v685 = vand.u32 %v285, 4294901760
        %686 = vmatmul.f32.gmra.mxu0 %v685
        %v687 = vpop.f32.mrf.mxu0
        %v688 = vadd.f32 %v647, %v687
        %689 = vdwg.mxu0
        %690 = vmatpush.msra.mxu0 0.0
        %691 = vmatpush.msra.mxu0 0.0
        %692 = vmatpush.msra.mxu0 0.0
        %693 = vmatpush.msra.mxu0 0.0
        %694 = vmatpush.msra.mxu0 0.0
        %695 = vmatpush.msra.mxu0 0.0
        %696 = vmatpush.msra.mxu0 0.0
        %697 = vmatpush.msra.mxu0 0.0
        %v698 = vand.u32 %v309, 4294901760
        %699 = vmatpush.msra.mxu0 %v698
        %v700 = vand.u32 %v308, 4294901760
        %701 = vmatpush.msra.mxu0 %v700
        %v702 = vand.u32 %v307, 4294901760
        %703 = vmatpush.msra.mxu0 %v702
        %v704 = vand.u32 %v306, 4294901760
        %705 = vmatpush.msra.mxu0 %v704
        %v706 = vand.u32 %v305, 4294901760
        %707 = vmatpush.msra.mxu0 %v706
        %v708 = vand.u32 %v304, 4294901760
        %709 = vmatpush.msra.mxu0 %v708
        %v710 = vand.u32 %v303, 4294901760
        %711 = vmatpush.msra.mxu0 %v710
        %v712 = vand.u32 %v302, 4294901760
        %713 = vmatpush.msra.mxu0 %v712
        %v714 = vand.u32 %v314, 4294901760
        %v715 = vsub.f32 %v314, %v714
        %v716 = vand.u32 %v715, 4294901760
        %v717 = vsub.f32 %v715, %v716
        %v718 = vand.u32 %v717, 4294901760
        %719 = vmatmul.f32.gmra.mxu0 %v718
        %v720 = vpop.f32.mrf.mxu0
        %v721 = vadd.f32 %v684, %v720
        %v722 = vand.u32 %v316, 4294901760
        %v723 = vsub.f32 %v316, %v722
        %v724 = vand.u32 %v723, 4294901760
        %v725 = vsub.f32 %v723, %v724
        %v726 = vand.u32 %v725, 4294901760
        %727 = vmatmul.f32.gmra.mxu0 %v726
        %v728 = vpop.f32.mrf.mxu0
        %v729 = vadd.f32 %v688, %v728
        %730 = vdwg.mxu0
        %731 = vmatpush.msra.mxu0 0.0
        %732 = vmatpush.msra.mxu0 0.0
        %733 = vmatpush.msra.mxu0 0.0
        %734 = vmatpush.msra.mxu0 0.0
        %735 = vmatpush.msra.mxu0 0.0
        %736 = vmatpush.msra.mxu0 0.0
        %737 = vmatpush.msra.mxu0 0.0
        %738 = vmatpush.msra.mxu0 0.0
        %v739 = vand.u32 %v309, 4294901760
        %v740 = vsub.f32 %v309, %v739
        %v741 = vand.u32 %v740, 4294901760
        %v742 = vsub.f32 %v740, %v741
        %v743 = vand.u32 %v742, 4294901760
        %744 = vmatpush.msra.mxu0 %v743
        %v745 = vand.u32 %v308, 4294901760
        %v746 = vsub.f32 %v308, %v745
        %v747 = vand.u32 %v746, 4294901760
        %v748 = vsub.f32 %v746, %v747
        %v749 = vand.u32 %v748, 4294901760
        %750 = vmatpush.msra.mxu0 %v749
        %v751 = vand.u32 %v307, 4294901760
        %v752 = vsub.f32 %v307, %v751
        %v753 = vand.u32 %v752, 4294901760
        %v754 = vsub.f32 %v752, %v753
        %v755 = vand.u32 %v754, 4294901760
        %756 = vmatpush.msra.mxu0 %v755
        %v757 = vand.u32 %v306, 4294901760
        %v758 = vsub.f32 %v306, %v757
        %v759 = vand.u32 %v758, 4294901760
        %v760 = vsub.f32 %v758, %v759
        %v761 = vand.u32 %v760, 4294901760
        %762 = vmatpush.msra.mxu0 %v761
        %v763 = vand.u32 %v305, 4294901760
        %v764 = vsub.f32 %v305, %v763
        %v765 = vand.u32 %v764, 4294901760
        %v766 = vsub.f32 %v764, %v765
        %v767 = vand.u32 %v766, 4294901760
        %768 = vmatpush.msra.mxu0 %v767
        %v769 = vand.u32 %v304, 4294901760
        %v770 = vsub.f32 %v304, %v769
        %v771 = vand.u32 %v770, 4294901760
        %v772 = vsub.f32 %v770, %v771
        %v773 = vand.u32 %v772, 4294901760
        %774 = vmatpush.msra.mxu0 %v773
        %v775 = vand.u32 %v303, 4294901760
        %v776 = vsub.f32 %v303, %v775
        %v777 = vand.u32 %v776, 4294901760
        %v778 = vsub.f32 %v776, %v777
        %v779 = vand.u32 %v778, 4294901760
        %780 = vmatpush.msra.mxu0 %v779
        %v781 = vand.u32 %v302, 4294901760
        %v782 = vsub.f32 %v302, %v781
        %v783 = vand.u32 %v782, 4294901760
        %v784 = vsub.f32 %v782, %v783
        %v785 = vand.u32 %v784, 4294901760
        %786 = vmatpush.msra.mxu0 %v785
        %v787 = vand.u32 %v314, 4294901760
        %788 = vmatmul.f32.gmra.mxu0 %v787
        %v789 = vpop.f32.mrf.mxu0
        %v790 = vadd.f32 %v721, %v789
        %v791 = vand.u32 %v316, 4294901760
        %792 = vmatmul.f32.gmra.mxu0 %v791
        %v793 = vpop.f32.mrf.mxu0
        %v794 = vadd.f32 %v729, %v793
        %795 = vdwg.mxu0
        %796 = vmatpush.msra.mxu0 0.0
        %797 = vmatpush.msra.mxu0 0.0
        %798 = vmatpush.msra.mxu0 0.0
        %799 = vmatpush.msra.mxu0 0.0
        %800 = vmatpush.msra.mxu0 0.0
        %801 = vmatpush.msra.mxu0 0.0
        %802 = vmatpush.msra.mxu0 0.0
        %803 = vmatpush.msra.mxu0 0.0
        %v804 = vand.u32 %v309, 4294901760
        %v805 = vsub.f32 %v309, %v804
        %806 = vmatpush.msra.mxu0 %v805
        %v807 = vand.u32 %v308, 4294901760
        %v808 = vsub.f32 %v308, %v807
        %809 = vmatpush.msra.mxu0 %v808
        %v810 = vand.u32 %v307, 4294901760
        %v811 = vsub.f32 %v307, %v810
        %812 = vmatpush.msra.mxu0 %v811
        %v813 = vand.u32 %v306, 4294901760
        %v814 = vsub.f32 %v306, %v813
        %815 = vmatpush.msra.mxu0 %v814
        %v816 = vand.u32 %v305, 4294901760
        %v817 = vsub.f32 %v305, %v816
        %818 = vmatpush.msra.mxu0 %v817
        %v819 = vand.u32 %v304, 4294901760
        %v820 = vsub.f32 %v304, %v819
        %821 = vmatpush.msra.mxu0 %v820
        %v822 = vand.u32 %v303, 4294901760
        %v823 = vsub.f32 %v303, %v822
        %824 = vmatpush.msra.mxu0 %v823
        %v825 = vand.u32 %v302, 4294901760
        %v826 = vsub.f32 %v302, %v825
        %827 = vmatpush.msra.mxu0 %v826
        %v828 = vand.u32 %v314, 4294901760
        %v829 = vsub.f32 %v314, %v828
        %830 = vmatmul.f32.gmra.mxu0 %v829
        %v831 = vpop.f32.mrf.mxu0
        %v832 = vadd.f32 %v790, %v831
        %v833 = vand.u32 %v316, 4294901760
        %v834 = vsub.f32 %v316, %v833
        %835 = vmatmul.f32.gmra.mxu0 %v834
        %v836 = vpop.f32.mrf.mxu0
        %v837 = vadd.f32 %v794, %v836
        %838 = vdwg.mxu0
        %839 = vmatpush.msra.mxu0 0.0
        %840 = vmatpush.msra.mxu0 0.0
        %841 = vmatpush.msra.mxu0 0.0
        %842 = vmatpush.msra.mxu0 0.0
        %843 = vmatpush.msra.mxu0 0.0
        %844 = vmatpush.msra.mxu0 0.0
        %845 = vmatpush.msra.mxu0 0.0
        %846 = vmatpush.msra.mxu0 0.0
        %v847 = vand.u32 %v309, 4294901760
        %848 = vmatpush.msra.mxu0 %v847
        %v849 = vand.u32 %v308, 4294901760
        %850 = vmatpush.msra.mxu0 %v849
        %v851 = vand.u32 %v307, 4294901760
        %852 = vmatpush.msra.mxu0 %v851
        %v853 = vand.u32 %v306, 4294901760
        %854 = vmatpush.msra.mxu0 %v853
        %v855 = vand.u32 %v305, 4294901760
        %856 = vmatpush.msra.mxu0 %v855
        %v857 = vand.u32 %v304, 4294901760
        %858 = vmatpush.msra.mxu0 %v857
        %v859 = vand.u32 %v303, 4294901760
        %860 = vmatpush.msra.mxu0 %v859
        %v861 = vand.u32 %v302, 4294901760
        %862 = vmatpush.msra.mxu0 %v861
        %v863 = vand.u32 %v314, 4294901760
        %v864 = vsub.f32 %v314, %v863
        %v865 = vand.u32 %v864, 4294901760
        %866 = vmatmul.f32.gmra.mxu0 %v865
        %v867 = vpop.f32.mrf.mxu0
        %v868 = vadd.f32 %v832, %v867
        %v869 = vand.u32 %v316, 4294901760
        %v870 = vsub.f32 %v316, %v869
        %v871 = vand.u32 %v870, 4294901760
        %872 = vmatmul.f32.gmra.mxu0 %v871
        %v873 = vpop.f32.mrf.mxu0
        %v874 = vadd.f32 %v837, %v873
        %875 = vdwg.mxu0
        %876 = vmatpush.msra.mxu0 0.0
        %877 = vmatpush.msra.mxu0 0.0
        %878 = vmatpush.msra.mxu0 0.0
        %879 = vmatpush.msra.mxu0 0.0
        %880 = vmatpush.msra.mxu0 0.0
        %881 = vmatpush.msra.mxu0 0.0
        %882 = vmatpush.msra.mxu0 0.0
        %883 = vmatpush.msra.mxu0 0.0
        %v884 = vand.u32 %v309, 4294901760
        %v885 = vsub.f32 %v309, %v884
        %v886 = vand.u32 %v885, 4294901760
        %887 = vmatpush.msra.mxu0 %v886
        %v888 = vand.u32 %v308, 4294901760
        %v889 = vsub.f32 %v308, %v888
        %v890 = vand.u32 %v889, 4294901760
        %891 = vmatpush.msra.mxu0 %v890
        %v892 = vand.u32 %v307, 4294901760
        %v893 = vsub.f32 %v307, %v892
        %v894 = vand.u32 %v893, 4294901760
        %895 = vmatpush.msra.mxu0 %v894
        %v896 = vand.u32 %v306, 4294901760
        %v897 = vsub.f32 %v306, %v896
        %v898 = vand.u32 %v897, 4294901760
        %899 = vmatpush.msra.mxu0 %v898
        %v900 = vand.u32 %v305, 4294901760
        %v901 = vsub.f32 %v305, %v900
        %v902 = vand.u32 %v901, 4294901760
        %903 = vmatpush.msra.mxu0 %v902
        %v904 = vand.u32 %v304, 4294901760
        %v905 = vsub.f32 %v304, %v904
        %v906 = vand.u32 %v905, 4294901760
        %907 = vmatpush.msra.mxu0 %v906
        %v908 = vand.u32 %v303, 4294901760
        %v909 = vsub.f32 %v303, %v908
        %v910 = vand.u32 %v909, 4294901760
        %911 = vmatpush.msra.mxu0 %v910
        %v912 = vand.u32 %v302, 4294901760
        %v913 = vsub.f32 %v302, %v912
        %v914 = vand.u32 %v913, 4294901760
        %915 = vmatpush.msra.mxu0 %v914
        %v916 = vand.u32 %v314, 4294901760
        %917 = vmatmul.f32.gmra.mxu0 %v916
        %v918 = vpop.f32.mrf.mxu0
        %v919 = vadd.f32 %v868, %v918
        %v920 = vand.u32 %v316, 4294901760
        %921 = vmatmul.f32.gmra.mxu0 %v920
        %v922 = vpop.f32.mrf.mxu0
        %v923 = vadd.f32 %v874, %v922
        %924 = vdwg.mxu0
        %925 = vmatpush.msra.mxu0 0.0
        %926 = vmatpush.msra.mxu0 0.0
        %927 = vmatpush.msra.mxu0 0.0
        %928 = vmatpush.msra.mxu0 0.0
        %929 = vmatpush.msra.mxu0 0.0
        %930 = vmatpush.msra.mxu0 0.0
        %931 = vmatpush.msra.mxu0 0.0
        %932 = vmatpush.msra.mxu0 0.0
        %v933 = vand.u32 %v309, 4294901760
        %934 = vmatpush.msra.mxu0 %v933
        %v935 = vand.u32 %v308, 4294901760
        %936 = vmatpush.msra.mxu0 %v935
        %v937 = vand.u32 %v307, 4294901760
        %938 = vmatpush.msra.mxu0 %v937
        %v939 = vand.u32 %v306, 4294901760
        %940 = vmatpush.msra.mxu0 %v939
        %v941 = vand.u32 %v305, 4294901760
        %942 = vmatpush.msra.mxu0 %v941
        %v943 = vand.u32 %v304, 4294901760
        %944 = vmatpush.msra.mxu0 %v943
        %v945 = vand.u32 %v303, 4294901760
        %946 = vmatpush.msra.mxu0 %v945
        %v947 = vand.u32 %v302, 4294901760
        %948 = vmatpush.msra.mxu0 %v947
        %v949 = vand.u32 %v314, 4294901760
        %950 = vmatmul.f32.gmra.mxu0 %v949
        %v951 = vpop.f32.mrf.mxu0
        %v952 = vadd.f32 %v919, %v951
        %v953 = vand.u32 %v316, 4294901760
        %954 = vmatmul.f32.gmra.mxu0 %v953
        %v955 = vpop.f32.mrf.mxu0
        %v956 = vadd.f32 %v923, %v955
        %957 = vdwg.mxu0
        %v958 = vtanh.pop %v952
        %v959 = vtanh.pop %v956
        %vm962 = vcmask 1040384
        %v963 = vrot.slane %v958, 7
        %v964 = vrot.slane %v959, 7
        %v965 = vsel %vm962, %v963, %v964
        %v969 = vsel %vm962, 0.0, %v963
        %v970 = vsel %vm962, %v964, 0.0
        %v973 = vrot.slane %v969, 1
        %v974 = vrot.slane %v965, 1
        %v975 = vsel %vm265, %v973, %v974
        %v976 = vrot.slane %v970, 1
        %v977 = vsel %vm265, %v974, %v976
        %v980 = vrot.slane %v969, 2
        %v981 = vrot.slane %v965, 2
        %v982 = vsel %vm277, %v980, %v981
        %v983 = vrot.slane %v970, 2
        %v984 = vsel %vm277, %v981, %v983
        %v987 = vld [vmem:[#allocation4] sm:$0xff]
        %v988 = vld [vmem:[#allocation4 + $0x8] sm:$0xff]
        %v989 = vld [vmem:[#allocation4 + $0x10] sm:$0xff]
        %v990 = vld [vmem:[#allocation4 + $0x18] sm:$0xff]
        %v991 = vld [vmem:[#allocation4 + $0x20] sm:$0xff]
        %v992 = vld [vmem:[#allocation4 + $0x28] sm:$0xff]
        %v993 = vld [vmem:[#allocation4 + $0x30] sm:$0xff]
        %v994 = vld [vmem:[#allocation4 + $0x38] sm:$0xff]
        %v995 = vld [vmem:[#allocation4 + $0x40] sm:$0xff]
        %v996 = vld [vmem:[#allocation4 + $0x48] sm:$0xff]
        %v997 = vld [vmem:[#allocation4 + $0x50] sm:$0xff]
        %v998 = vld [vmem:[#allocation4 + $0x58] sm:$0xff]
        %v999 = vld [vmem:[#allocation4 + $0x60] sm:$0xff]
        %v1000 = vld [vmem:[#allocation4 + $0x68] sm:$0xff]
        %v1001 = vld [vmem:[#allocation4 + $0x70] sm:$0xff]
        %v1002 = vld [vmem:[#allocation4 + $0x78] sm:$0xff]
        %v1003 = vld [vmem:[#allocation4 + $0x80] sm:$0xff]
        %v1004 = vld [vmem:[#allocation4 + $0x88] sm:$0xff]
        %v1005 = vld [vmem:[#allocation4 + $0x90] sm:$0xff]
        %v1006 = vld [vmem:[#allocation4 + $0x98] sm:$0xff]
        %v1007 = vld [vmem:[#allocation4 + $0xa0] sm:$0xff]
        %v1008 = vld [vmem:[#allocation4 + $0xa8] sm:$0xff]
        %v1009 = vld [vmem:[#allocation4 + $0xb0] sm:$0xff]
        %v1010 = vld [vmem:[#allocation4 + $0xb8] sm:$0xff]
        %v1011 = vld [vmem:[#allocation4 + $0xc0] sm:$0xff]
        %v1012 = vld [vmem:[#allocation4 + $0xc8] sm:$0xff]
        %v1013 = vld [vmem:[#allocation4 + $0xd0] sm:$0xff]
        %v1014 = vld [vmem:[#allocation4 + $0xd8] sm:$0xff]
        %v1015 = vld [vmem:[#allocation4 + $0xe0] sm:$0xff]
        %v1016 = vld [vmem:[#allocation4 + $0xe8] sm:$0xff]
        %v1017 = vld [vmem:[#allocation4 + $0xf0] sm:$0xff]
        %v1018 = vld [vmem:[#allocation4 + $0xf8] sm:$0xff]
        %v1019 = vld [vmem:[#allocation4 + $0x100] sm:$0xff]
        %v1020 = vld [vmem:[#allocation4 + $0x108] sm:$0xff]
        %v1021 = vld [vmem:[#allocation4 + $0x110] sm:$0xff]
        %v1022 = vld [vmem:[#allocation4 + $0x118] sm:$0xff]
        %v1023 = vld [vmem:[#allocation4 + $0x120] sm:$0xff]
        %v1024 = vld [vmem:[#allocation4 + $0x128] sm:$0xff]
        %v1025 = vld [vmem:[#allocation4 + $0x130] sm:$0xff]
        %v1026 = vld [vmem:[#allocation4 + $0x138] sm:$0xff]
        %v1027 = vld [vmem:[#allocation4 + $0x140] sm:$0xff]
        %v1028 = vld [vmem:[#allocation4 + $0x148] sm:$0xff]
        %v1029 = vld [vmem:[#allocation4 + $0x150] sm:$0xff]
        %v1030 = vld [vmem:[#allocation4 + $0x158] sm:$0xff]
        %v1031 = vld [vmem:[#allocation4 + $0x160] sm:$0xff]
        %v1032 = vld [vmem:[#allocation4 + $0x168] sm:$0xff]
        %v1033 = vld [vmem:[#allocation4 + $0x170] sm:$0xff]
        %v1034 = vld [vmem:[#allocation4 + $0x178] sm:$0xff]
        %v1035 = vld [vmem:[%s4] sm:$0x1]
        %v1037 = vperm.slane %v1035, 0
        %v1039 = vand.u32 %v1002, 4294901760
        %1040 = vmatpush.msra.mxu0 %v1039
        %v1041 = vand.u32 %v1001, 4294901760
        %1042 = vmatpush.msra.mxu0 %v1041
        %v1043 = vand.u32 %v1000, 4294901760
        %1044 = vmatpush.msra.mxu0 %v1043
        %v1045 = vand.u32 %v999, 4294901760
        %1046 = vmatpush.msra.mxu0 %v1045
        %v1047 = vand.u32 %v998, 4294901760
        %1048 = vmatpush.msra.mxu0 %v1047
        %v1049 = vand.u32 %v997, 4294901760
        %1050 = vmatpush.msra.mxu0 %v1049
        %v1051 = vand.u32 %v996, 4294901760
        %1052 = vmatpush.msra.mxu0 %v1051
        %v1053 = vand.u32 %v995, 4294901760
        %1054 = vmatpush.msra.mxu0 %v1053
        %v1055 = vand.u32 %v994, 4294901760
        %1056 = vmatpush.msra.mxu0 %v1055
        %v1057 = vand.u32 %v993, 4294901760
        %1058 = vmatpush.msra.mxu0 %v1057
        %v1059 = vand.u32 %v992, 4294901760
        %1060 = vmatpush.msra.mxu0 %v1059
        %v1061 = vand.u32 %v991, 4294901760
        %1062 = vmatpush.msra.mxu0 %v1061
        %v1063 = vand.u32 %v990, 4294901760
        %1064 = vmatpush.msra.mxu0 %v1063
        %v1065 = vand.u32 %v989, 4294901760
        %1066 = vmatpush.msra.mxu0 %v1065
        %v1067 = vand.u32 %v988, 4294901760
        %1068 = vmatpush.msra.mxu0 %v1067
        %v1069 = vand.u32 %v987, 4294901760
        %1070 = vmatpush.msra.mxu0 %v1069
        %v1071 = vand.u32 %v969, 4294901760
        %v1072 = vsub.f32 %v969, %v1071
        %v1073 = vand.u32 %v1072, 4294901760
        %v1074 = vsub.f32 %v1072, %v1073
        %v1075 = vand.u32 %v1074, 4294901760
        %1076 = vmatmul.f32.gmra.mxu0 %v1075
        %v1077 = vpop.f32.mrf.mxu0
        %v1078 = vadd.f32 %v1037, %v1077
        %v1079 = vand.u32 %v965, 4294901760
        %v1080 = vsub.f32 %v965, %v1079
        %v1081 = vand.u32 %v1080, 4294901760
        %v1082 = vsub.f32 %v1080, %v1081
        %v1083 = vand.u32 %v1082, 4294901760
        %1084 = vmatmul.f32.gmra.mxu0 %v1083
        %v1085 = vpop.f32.mrf.mxu0
        %v1086 = vadd.f32 %v1037, %v1085
        %1087 = vdwg.mxu0
        %v1088 = vand.u32 %v1002, 4294901760
        %v1089 = vsub.f32 %v1002, %v1088
        %v1090 = vand.u32 %v1089, 4294901760
        %v1091 = vsub.f32 %v1089, %v1090
        %v1092 = vand.u32 %v1091, 4294901760
        %1093 = vmatpush.msra.mxu0 %v1092
        %v1094 = vand.u32 %v1001, 4294901760
        %v1095 = vsub.f32 %v1001, %v1094
        %v1096 = vand.u32 %v1095, 4294901760
        %v1097 = vsub.f32 %v1095, %v1096
        %v1098 = vand.u32 %v1097, 4294901760
        %1099 = vmatpush.msra.mxu0 %v1098
        %v1100 = vand.u32 %v1000, 4294901760
        %v1101 = vsub.f32 %v1000, %v1100
        %v1102 = vand.u32 %v1101, 4294901760
        %v1103 = vsub.f32 %v1101, %v1102
        %v1104 = vand.u32 %v1103, 4294901760
        %1105 = vmatpush.msra.mxu0 %v1104
        %v1106 = vand.u32 %v999, 4294901760
        %v1107 = vsub.f32 %v999, %v1106
        %v1108 = vand.u32 %v1107, 4294901760
        %v1109 = vsub.f32 %v1107, %v1108
        %v1110 = vand.u32 %v1109, 4294901760
        %1111 = vmatpush.msra.mxu0 %v1110
        %v1112 = vand.u32 %v998, 4294901760
        %v1113 = vsub.f32 %v998, %v1112
        %v1114 = vand.u32 %v1113, 4294901760
        %v1115 = vsub.f32 %v1113, %v1114
        %v1116 = vand.u32 %v1115, 4294901760
        %1117 = vmatpush.msra.mxu0 %v1116
        %v1118 = vand.u32 %v997, 4294901760
        %v1119 = vsub.f32 %v997, %v1118
        %v1120 = vand.u32 %v1119, 4294901760
        %v1121 = vsub.f32 %v1119, %v1120
        %v1122 = vand.u32 %v1121, 4294901760
        %1123 = vmatpush.msra.mxu0 %v1122
        %v1124 = vand.u32 %v996, 4294901760
        %v1125 = vsub.f32 %v996, %v1124
        %v1126 = vand.u32 %v1125, 4294901760
        %v1127 = vsub.f32 %v1125, %v1126
        %v1128 = vand.u32 %v1127, 4294901760
        %1129 = vmatpush.msra.mxu0 %v1128
        %v1130 = vand.u32 %v995, 4294901760
        %v1131 = vsub.f32 %v995, %v1130
        %v1132 = vand.u32 %v1131, 4294901760
        %v1133 = vsub.f32 %v1131, %v1132
        %v1134 = vand.u32 %v1133, 4294901760
        %1135 = vmatpush.msra.mxu0 %v1134
        %v1136 = vand.u32 %v994, 4294901760
        %v1137 = vsub.f32 %v994, %v1136
        %v1138 = vand.u32 %v1137, 4294901760
        %v1139 = vsub.f32 %v1137, %v1138
        %v1140 = vand.u32 %v1139, 4294901760
        %1141 = vmatpush.msra.mxu0 %v1140
        %v1142 = vand.u32 %v993, 4294901760
        %v1143 = vsub.f32 %v993, %v1142
        %v1144 = vand.u32 %v1143, 4294901760
        %v1145 = vsub.f32 %v1143, %v1144
        %v1146 = vand.u32 %v1145, 4294901760
        %1147 = vmatpush.msra.mxu0 %v1146
        %v1148 = vand.u32 %v992, 4294901760
        %v1149 = vsub.f32 %v992, %v1148
        %v1150 = vand.u32 %v1149, 4294901760
        %v1151 = vsub.f32 %v1149, %v1150
        %v1152 = vand.u32 %v1151, 4294901760
        %1153 = vmatpush.msra.mxu0 %v1152
        %v1154 = vand.u32 %v991, 4294901760
        %v1155 = vsub.f32 %v991, %v1154
        %v1156 = vand.u32 %v1155, 4294901760
        %v1157 = vsub.f32 %v1155, %v1156
        %v1158 = vand.u32 %v1157, 4294901760
        %1159 = vmatpush.msra.mxu0 %v1158
        %v1160 = vand.u32 %v990, 4294901760
        %v1161 = vsub.f32 %v990, %v1160
        %v1162 = vand.u32 %v1161, 4294901760
        %v1163 = vsub.f32 %v1161, %v1162
        %v1164 = vand.u32 %v1163, 4294901760
        %1165 = vmatpush.msra.mxu0 %v1164
        %v1166 = vand.u32 %v989, 4294901760
        %v1167 = vsub.f32 %v989, %v1166
        %v1168 = vand.u32 %v1167, 4294901760
        %v1169 = vsub.f32 %v1167, %v1168
        %v1170 = vand.u32 %v1169, 4294901760
        %1171 = vmatpush.msra.mxu0 %v1170
        %v1172 = vand.u32 %v988, 4294901760
        %v1173 = vsub.f32 %v988, %v1172
        %v1174 = vand.u32 %v1173, 4294901760
        %v1175 = vsub.f32 %v1173, %v1174
        %v1176 = vand.u32 %v1175, 4294901760
        %1177 = vmatpush.msra.mxu0 %v1176
        %v1178 = vand.u32 %v987, 4294901760
        %v1179 = vsub.f32 %v987, %v1178
        %v1180 = vand.u32 %v1179, 4294901760
        %v1181 = vsub.f32 %v1179, %v1180
        %v1182 = vand.u32 %v1181, 4294901760
        %1183 = vmatpush.msra.mxu0 %v1182
        %v1184 = vand.u32 %v969, 4294901760
        %1185 = vmatmul.f32.gmra.mxu0 %v1184
        %v1186 = vpop.f32.mrf.mxu0
        %v1187 = vadd.f32 %v1078, %v1186
        %v1188 = vand.u32 %v965, 4294901760
        %1189 = vmatmul.f32.gmra.mxu0 %v1188
        %v1190 = vpop.f32.mrf.mxu0
        %v1191 = vadd.f32 %v1086, %v1190
        %1192 = vdwg.mxu0
        %v1193 = vand.u32 %v1002, 4294901760
        %v1194 = vsub.f32 %v1002, %v1193
        %1195 = vmatpush.msra.mxu0 %v1194
        %v1196 = vand.u32 %v1001, 4294901760
        %v1197 = vsub.f32 %v1001, %v1196
        %1198 = vmatpush.msra.mxu0 %v1197
        %v1199 = vand.u32 %v1000, 4294901760
        %v1200 = vsub.f32 %v1000, %v1199
        %1201 = vmatpush.msra.mxu0 %v1200
        %v1202 = vand.u32 %v999, 4294901760
        %v1203 = vsub.f32 %v999, %v1202
        %1204 = vmatpush.msra.mxu0 %v1203
        %v1205 = vand.u32 %v998, 4294901760
        %v1206 = vsub.f32 %v998, %v1205
        %1207 = vmatpush.msra.mxu0 %v1206
        %v1208 = vand.u32 %v997, 4294901760
        %v1209 = vsub.f32 %v997, %v1208
        %1210 = vmatpush.msra.mxu0 %v1209
        %v1211 = vand.u32 %v996, 4294901760
        %v1212 = vsub.f32 %v996, %v1211
        %1213 = vmatpush.msra.mxu0 %v1212
        %v1214 = vand.u32 %v995, 4294901760
        %v1215 = vsub.f32 %v995, %v1214
        %1216 = vmatpush.msra.mxu0 %v1215
        %v1217 = vand.u32 %v994, 4294901760
        %v1218 = vsub.f32 %v994, %v1217
        %1219 = vmatpush.msra.mxu0 %v1218
        %v1220 = vand.u32 %v993, 4294901760
        %v1221 = vsub.f32 %v993, %v1220
        %1222 = vmatpush.msra.mxu0 %v1221
        %v1223 = vand.u32 %v992, 4294901760
        %v1224 = vsub.f32 %v992, %v1223
        %1225 = vmatpush.msra.mxu0 %v1224
        %v1226 = vand.u32 %v991, 4294901760
        %v1227 = vsub.f32 %v991, %v1226
        %1228 = vmatpush.msra.mxu0 %v1227
        %v1229 = vand.u32 %v990, 4294901760
        %v1230 = vsub.f32 %v990, %v1229
        %1231 = vmatpush.msra.mxu0 %v1230
        %v1232 = vand.u32 %v989, 4294901760
        %v1233 = vsub.f32 %v989, %v1232
        %1234 = vmatpush.msra.mxu0 %v1233
        %v1235 = vand.u32 %v988, 4294901760
        %v1236 = vsub.f32 %v988, %v1235
        %1237 = vmatpush.msra.mxu0 %v1236
        %v1238 = vand.u32 %v987, 4294901760
        %v1239 = vsub.f32 %v987, %v1238
        %1240 = vmatpush.msra.mxu0 %v1239
        %v1241 = vand.u32 %v969, 4294901760
        %v1242 = vsub.f32 %v969, %v1241
        %1243 = vmatmul.f32.gmra.mxu0 %v1242
        %v1244 = vpop.f32.mrf.mxu0
        %v1245 = vadd.f32 %v1187, %v1244
        %v1246 = vand.u32 %v965, 4294901760
        %v1247 = vsub.f32 %v965, %v1246
        %1248 = vmatmul.f32.gmra.mxu0 %v1247
        %v1249 = vpop.f32.mrf.mxu0
        %v1250 = vadd.f32 %v1191, %v1249
        %1251 = vdwg.mxu0
        %v1252 = vand.u32 %v1002, 4294901760
        %1253 = vmatpush.msra.mxu0 %v1252
        %v1254 = vand.u32 %v1001, 4294901760
        %1255 = vmatpush.msra.mxu0 %v1254
        %v1256 = vand.u32 %v1000, 4294901760
        %1257 = vmatpush.msra.mxu0 %v1256
        %v1258 = vand.u32 %v999, 4294901760
        %1259 = vmatpush.msra.mxu0 %v1258
        %v1260 = vand.u32 %v998, 4294901760
        %1261 = vmatpush.msra.mxu0 %v1260
        %v1262 = vand.u32 %v997, 4294901760
        %1263 = vmatpush.msra.mxu0 %v1262
        %v1264 = vand.u32 %v996, 4294901760
        %1265 = vmatpush.msra.mxu0 %v1264
        %v1266 = vand.u32 %v995, 4294901760
        %1267 = vmatpush.msra.mxu0 %v1266
        %v1268 = vand.u32 %v994, 4294901760
        %1269 = vmatpush.msra.mxu0 %v1268
        %v1270 = vand.u32 %v993, 4294901760
        %1271 = vmatpush.msra.mxu0 %v1270
        %v1272 = vand.u32 %v992, 4294901760
        %1273 = vmatpush.msra.mxu0 %v1272
        %v1274 = vand.u32 %v991, 4294901760
        %1275 = vmatpush.msra.mxu0 %v1274
        %v1276 = vand.u32 %v990, 4294901760
        %1277 = vmatpush.msra.mxu0 %v1276
        %v1278 = vand.u32 %v989, 4294901760
        %1279 = vmatpush.msra.mxu0 %v1278
        %v1280 = vand.u32 %v988, 4294901760
        %1281 = vmatpush.msra.mxu0 %v1280
        %v1282 = vand.u32 %v987, 4294901760
        %1283 = vmatpush.msra.mxu0 %v1282
        %v1284 = vand.u32 %v969, 4294901760
        %v1285 = vsub.f32 %v969, %v1284
        %v1286 = vand.u32 %v1285, 4294901760
        %1287 = vmatmul.f32.gmra.mxu0 %v1286
        %v1288 = vpop.f32.mrf.mxu0
        %v1289 = vadd.f32 %v1245, %v1288
        %v1290 = vand.u32 %v965, 4294901760
        %v1291 = vsub.f32 %v965, %v1290
        %v1292 = vand.u32 %v1291, 4294901760
        %1293 = vmatmul.f32.gmra.mxu0 %v1292
        %v1294 = vpop.f32.mrf.mxu0
        %v1295 = vadd.f32 %v1250, %v1294
        %1296 = vdwg.mxu0
        %v1297 = vand.u32 %v1002, 4294901760
        %v1298 = vsub.f32 %v1002, %v1297
        %v1299 = vand.u32 %v1298, 4294901760
        %1300 = vmatpush.msra.mxu0 %v1299
        %v1301 = vand.u32 %v1001, 4294901760
        %v1302 = vsub.f32 %v1001, %v1301
        %v1303 = vand.u32 %v1302, 4294901760
        %1304 = vmatpush.msra.mxu0 %v1303
        %v1305 = vand.u32 %v1000, 4294901760
        %v1306 = vsub.f32 %v1000, %v1305
        %v1307 = vand.u32 %v1306, 4294901760
        %1308 = vmatpush.msra.mxu0 %v1307
        %v1309 = vand.u32 %v999, 4294901760
        %v1310 = vsub.f32 %v999, %v1309
        %v1311 = vand.u32 %v1310, 4294901760
        %1312 = vmatpush.msra.mxu0 %v1311
        %v1313 = vand.u32 %v998, 4294901760
        %v1314 = vsub.f32 %v998, %v1313
        %v1315 = vand.u32 %v1314, 4294901760
        %1316 = vmatpush.msra.mxu0 %v1315
        %v1317 = vand.u32 %v997, 4294901760
        %v1318 = vsub.f32 %v997, %v1317
        %v1319 = vand.u32 %v1318, 4294901760
        %1320 = vmatpush.msra.mxu0 %v1319
        %v1321 = vand.u32 %v996, 4294901760
        %v1322 = vsub.f32 %v996, %v1321
        %v1323 = vand.u32 %v1322, 4294901760
        %1324 = vmatpush.msra.mxu0 %v1323
        %v1325 = vand.u32 %v995, 4294901760
        %v1326 = vsub.f32 %v995, %v1325
        %v1327 = vand.u32 %v1326, 4294901760
        %1328 = vmatpush.msra.mxu0 %v1327
        %v1329 = vand.u32 %v994, 4294901760
        %v1330 = vsub.f32 %v994, %v1329
        %v1331 = vand.u32 %v1330, 4294901760
        %1332 = vmatpush.msra.mxu0 %v1331
        %v1333 = vand.u32 %v993, 4294901760
        %v1334 = vsub.f32 %v993, %v1333
        %v1335 = vand.u32 %v1334, 4294901760
        %1336 = vmatpush.msra.mxu0 %v1335
        %v1337 = vand.u32 %v992, 4294901760
        %v1338 = vsub.f32 %v992, %v1337
        %v1339 = vand.u32 %v1338, 4294901760
        %1340 = vmatpush.msra.mxu0 %v1339
        %v1341 = vand.u32 %v991, 4294901760
        %v1342 = vsub.f32 %v991, %v1341
        %v1343 = vand.u32 %v1342, 4294901760
        %1344 = vmatpush.msra.mxu0 %v1343
        %v1345 = vand.u32 %v990, 4294901760
        %v1346 = vsub.f32 %v990, %v1345
        %v1347 = vand.u32 %v1346, 4294901760
        %1348 = vmatpush.msra.mxu0 %v1347
        %v1349 = vand.u32 %v989, 4294901760
        %v1350 = vsub.f32 %v989, %v1349
        %v1351 = vand.u32 %v1350, 4294901760
        %1352 = vmatpush.msra.mxu0 %v1351
        %v1353 = vand.u32 %v988, 4294901760
        %v1354 = vsub.f32 %v988, %v1353
        %v1355 = vand.u32 %v1354, 4294901760
        %1356 = vmatpush.msra.mxu0 %v1355
        %v1357 = vand.u32 %v987, 4294901760
        %v1358 = vsub.f32 %v987, %v1357
        %v1359 = vand.u32 %v1358, 4294901760
        %1360 = vmatpush.msra.mxu0 %v1359
        %v1361 = vand.u32 %v969, 4294901760
        %1362 = vmatmul.f32.gmra.mxu0 %v1361
        %v1363 = vpop.f32.mrf.mxu0
        %v1364 = vadd.f32 %v1289, %v1363
        %v1365 = vand.u32 %v965, 4294901760
        %1366 = vmatmul.f32.gmra.mxu0 %v1365
        %v1367 = vpop.f32.mrf.mxu0
        %v1368 = vadd.f32 %v1295, %v1367
        %1369 = vdwg.mxu0
        %v1370 = vand.u32 %v1002, 4294901760
        %1371 = vmatpush.msra.mxu0 %v1370
        %v1372 = vand.u32 %v1001, 4294901760
        %1373 = vmatpush.msra.mxu0 %v1372
        %v1374 = vand.u32 %v1000, 4294901760
        %1375 = vmatpush.msra.mxu0 %v1374
        %v1376 = vand.u32 %v999, 4294901760
        %1377 = vmatpush.msra.mxu0 %v1376
        %v1378 = vand.u32 %v998, 4294901760
        %1379 = vmatpush.msra.mxu0 %v1378
        %v1380 = vand.u32 %v997, 4294901760
        %1381 = vmatpush.msra.mxu0 %v1380
        %v1382 = vand.u32 %v996, 4294901760
        %1383 = vmatpush.msra.mxu0 %v1382
        %v1384 = vand.u32 %v995, 4294901760
        %1385 = vmatpush.msra.mxu0 %v1384
        %v1386 = vand.u32 %v994, 4294901760
        %1387 = vmatpush.msra.mxu0 %v1386
        %v1388 = vand.u32 %v993, 4294901760
        %1389 = vmatpush.msra.mxu0 %v1388
        %v1390 = vand.u32 %v992, 4294901760
        %1391 = vmatpush.msra.mxu0 %v1390
        %v1392 = vand.u32 %v991, 4294901760
        %1393 = vmatpush.msra.mxu0 %v1392
        %v1394 = vand.u32 %v990, 4294901760
        %1395 = vmatpush.msra.mxu0 %v1394
        %v1396 = vand.u32 %v989, 4294901760
        %1397 = vmatpush.msra.mxu0 %v1396
        %v1398 = vand.u32 %v988, 4294901760
        %1399 = vmatpush.msra.mxu0 %v1398
        %v1400 = vand.u32 %v987, 4294901760
        %1401 = vmatpush.msra.mxu0 %v1400
        %v1402 = vand.u32 %v969, 4294901760
        %1403 = vmatmul.f32.gmra.mxu0 %v1402
        %v1404 = vpop.f32.mrf.mxu0
        %v1405 = vadd.f32 %v1364, %v1404
        %v1406 = vand.u32 %v965, 4294901760
        %1407 = vmatmul.f32.gmra.mxu0 %v1406
        %v1408 = vpop.f32.mrf.mxu0
        %v1409 = vadd.f32 %v1368, %v1408
        %1410 = vdwg.mxu0
        %v1411 = vand.u32 %v1018, 4294901760
        %1412 = vmatpush.msra.mxu0 %v1411
        %v1413 = vand.u32 %v1017, 4294901760
        %1414 = vmatpush.msra.mxu0 %v1413
        %v1415 = vand.u32 %v1016, 4294901760
        %1416 = vmatpush.msra.mxu0 %v1415
        %v1417 = vand.u32 %v1015, 4294901760
        %1418 = vmatpush.msra.mxu0 %v1417
        %v1419 = vand.u32 %v1014, 4294901760
        %1420 = vmatpush.msra.mxu0 %v1419
        %v1421 = vand.u32 %v1013, 4294901760
        %1422 = vmatpush.msra.mxu0 %v1421
        %v1423 = vand.u32 %v1012, 4294901760
        %1424 = vmatpush.msra.mxu0 %v1423
        %v1425 = vand.u32 %v1011, 4294901760
        %1426 = vmatpush.msra.mxu0 %v1425
        %v1427 = vand.u32 %v1010, 4294901760
        %1428 = vmatpush.msra.mxu0 %v1427
        %v1429 = vand.u32 %v1009, 4294901760
        %1430 = vmatpush.msra.mxu0 %v1429
        %v1431 = vand.u32 %v1008, 4294901760
        %1432 = vmatpush.msra.mxu0 %v1431
        %v1433 = vand.u32 %v1007, 4294901760
        %1434 = vmatpush.msra.mxu0 %v1433
        %v1435 = vand.u32 %v1006, 4294901760
        %1436 = vmatpush.msra.mxu0 %v1435
        %v1437 = vand.u32 %v1005, 4294901760
        %1438 = vmatpush.msra.mxu0 %v1437
        %v1439 = vand.u32 %v1004, 4294901760
        %1440 = vmatpush.msra.mxu0 %v1439
        %v1441 = vand.u32 %v1003, 4294901760
        %1442 = vmatpush.msra.mxu0 %v1441
        %v1443 = vand.u32 %v975, 4294901760
        %v1444 = vsub.f32 %v975, %v1443
        %v1445 = vand.u32 %v1444, 4294901760
        %v1446 = vsub.f32 %v1444, %v1445
        %v1447 = vand.u32 %v1446, 4294901760
        %1448 = vmatmul.f32.gmra.mxu0 %v1447
        %v1449 = vpop.f32.mrf.mxu0
        %v1450 = vadd.f32 %v1405, %v1449
        %v1451 = vand.u32 %v977, 4294901760
        %v1452 = vsub.f32 %v977, %v1451
        %v1453 = vand.u32 %v1452, 4294901760
        %v1454 = vsub.f32 %v1452, %v1453
        %v1455 = vand.u32 %v1454, 4294901760
        %1456 = vmatmul.f32.gmra.mxu0 %v1455
        %v1457 = vpop.f32.mrf.mxu0
        %v1458 = vadd.f32 %v1409, %v1457
        %1459 = vdwg.mxu0
        %v1460 = vand.u32 %v1018, 4294901760
        %v1461 = vsub.f32 %v1018, %v1460
        %v1462 = vand.u32 %v1461, 4294901760
        %v1463 = vsub.f32 %v1461, %v1462
        %v1464 = vand.u32 %v1463, 4294901760
        %1465 = vmatpush.msra.mxu0 %v1464
        %v1466 = vand.u32 %v1017, 4294901760
        %v1467 = vsub.f32 %v1017, %v1466
        %v1468 = vand.u32 %v1467, 4294901760
        %v1469 = vsub.f32 %v1467, %v1468
        %v1470 = vand.u32 %v1469, 4294901760
        %1471 = vmatpush.msra.mxu0 %v1470
        %v1472 = vand.u32 %v1016, 4294901760
        %v1473 = vsub.f32 %v1016, %v1472
        %v1474 = vand.u32 %v1473, 4294901760
        %v1475 = vsub.f32 %v1473, %v1474
        %v1476 = vand.u32 %v1475, 4294901760
        %1477 = vmatpush.msra.mxu0 %v1476
        %v1478 = vand.u32 %v1015, 4294901760
        %v1479 = vsub.f32 %v1015, %v1478
        %v1480 = vand.u32 %v1479, 4294901760
        %v1481 = vsub.f32 %v1479, %v1480
        %v1482 = vand.u32 %v1481, 4294901760
        %1483 = vmatpush.msra.mxu0 %v1482
        %v1484 = vand.u32 %v1014, 4294901760
        %v1485 = vsub.f32 %v1014, %v1484
        %v1486 = vand.u32 %v1485, 4294901760
        %v1487 = vsub.f32 %v1485, %v1486
        %v1488 = vand.u32 %v1487, 4294901760
        %1489 = vmatpush.msra.mxu0 %v1488
        %v1490 = vand.u32 %v1013, 4294901760
        %v1491 = vsub.f32 %v1013, %v1490
        %v1492 = vand.u32 %v1491, 4294901760
        %v1493 = vsub.f32 %v1491, %v1492
        %v1494 = vand.u32 %v1493, 4294901760
        %1495 = vmatpush.msra.mxu0 %v1494
        %v1496 = vand.u32 %v1012, 4294901760
        %v1497 = vsub.f32 %v1012, %v1496
        %v1498 = vand.u32 %v1497, 4294901760
        %v1499 = vsub.f32 %v1497, %v1498
        %v1500 = vand.u32 %v1499, 4294901760
        %1501 = vmatpush.msra.mxu0 %v1500
        %v1502 = vand.u32 %v1011, 4294901760
        %v1503 = vsub.f32 %v1011, %v1502
        %v1504 = vand.u32 %v1503, 4294901760
        %v1505 = vsub.f32 %v1503, %v1504
        %v1506 = vand.u32 %v1505, 4294901760
        %1507 = vmatpush.msra.mxu0 %v1506
        %v1508 = vand.u32 %v1010, 4294901760
        %v1509 = vsub.f32 %v1010, %v1508
        %v1510 = vand.u32 %v1509, 4294901760
        %v1511 = vsub.f32 %v1509, %v1510
        %v1512 = vand.u32 %v1511, 4294901760
        %1513 = vmatpush.msra.mxu0 %v1512
        %v1514 = vand.u32 %v1009, 4294901760
        %v1515 = vsub.f32 %v1009, %v1514
        %v1516 = vand.u32 %v1515, 4294901760
        %v1517 = vsub.f32 %v1515, %v1516
        %v1518 = vand.u32 %v1517, 4294901760
        %1519 = vmatpush.msra.mxu0 %v1518
        %v1520 = vand.u32 %v1008, 4294901760
        %v1521 = vsub.f32 %v1008, %v1520
        %v1522 = vand.u32 %v1521, 4294901760
        %v1523 = vsub.f32 %v1521, %v1522
        %v1524 = vand.u32 %v1523, 4294901760
        %1525 = vmatpush.msra.mxu0 %v1524
        %v1526 = vand.u32 %v1007, 4294901760
        %v1527 = vsub.f32 %v1007, %v1526
        %v1528 = vand.u32 %v1527, 4294901760
        %v1529 = vsub.f32 %v1527, %v1528
        %v1530 = vand.u32 %v1529, 4294901760
        %1531 = vmatpush.msra.mxu0 %v1530
        %v1532 = vand.u32 %v1006, 4294901760
        %v1533 = vsub.f32 %v1006, %v1532
        %v1534 = vand.u32 %v1533, 4294901760
        %v1535 = vsub.f32 %v1533, %v1534
        %v1536 = vand.u32 %v1535, 4294901760
        %1537 = vmatpush.msra.mxu0 %v1536
        %v1538 = vand.u32 %v1005, 4294901760
        %v1539 = vsub.f32 %v1005, %v1538
        %v1540 = vand.u32 %v1539, 4294901760
        %v1541 = vsub.f32 %v1539, %v1540
        %v1542 = vand.u32 %v1541, 4294901760
        %1543 = vmatpush.msra.mxu0 %v1542
        %v1544 = vand.u32 %v1004, 4294901760
        %v1545 = vsub.f32 %v1004, %v1544
        %v1546 = vand.u32 %v1545, 4294901760
        %v1547 = vsub.f32 %v1545, %v1546
        %v1548 = vand.u32 %v1547, 4294901760
        %1549 = vmatpush.msra.mxu0 %v1548
        %v1550 = vand.u32 %v1003, 4294901760
        %v1551 = vsub.f32 %v1003, %v1550
        %v1552 = vand.u32 %v1551, 4294901760
        %v1553 = vsub.f32 %v1551, %v1552
        %v1554 = vand.u32 %v1553, 4294901760
        %1555 = vmatpush.msra.mxu0 %v1554
        %v1556 = vand.u32 %v975, 4294901760
        %1557 = vmatmul.f32.gmra.mxu0 %v1556
        %v1558 = vpop.f32.mrf.mxu0
        %v1559 = vadd.f32 %v1450, %v1558
        %v1560 = vand.u32 %v977, 4294901760
        %1561 = vmatmul.f32.gmra.mxu0 %v1560
        %v1562 = vpop.f32.mrf.mxu0
        %v1563 = vadd.f32 %v1458, %v1562
        %1564 = vdwg.mxu0
        %v1565 = vand.u32 %v1018, 4294901760
        %v1566 = vsub.f32 %v1018, %v1565
        %1567 = vmatpush.msra.mxu0 %v1566
        %v1568 = vand.u32 %v1017, 4294901760
        %v1569 = vsub.f32 %v1017, %v1568
        %1570 = vmatpush.msra.mxu0 %v1569
        %v1571 = vand.u32 %v1016, 4294901760
        %v1572 = vsub.f32 %v1016, %v1571
        %1573 = vmatpush.msra.mxu0 %v1572
        %v1574 = vand.u32 %v1015, 4294901760
        %v1575 = vsub.f32 %v1015, %v1574
        %1576 = vmatpush.msra.mxu0 %v1575
        %v1577 = vand.u32 %v1014, 4294901760
        %v1578 = vsub.f32 %v1014, %v1577
        %1579 = vmatpush.msra.mxu0 %v1578
        %v1580 = vand.u32 %v1013, 4294901760
        %v1581 = vsub.f32 %v1013, %v1580
        %1582 = vmatpush.msra.mxu0 %v1581
        %v1583 = vand.u32 %v1012, 4294901760
        %v1584 = vsub.f32 %v1012, %v1583
        %1585 = vmatpush.msra.mxu0 %v1584
        %v1586 = vand.u32 %v1011, 4294901760
        %v1587 = vsub.f32 %v1011, %v1586
        %1588 = vmatpush.msra.mxu0 %v1587
        %v1589 = vand.u32 %v1010, 4294901760
        %v1590 = vsub.f32 %v1010, %v1589
        %1591 = vmatpush.msra.mxu0 %v1590
        %v1592 = vand.u32 %v1009, 4294901760
        %v1593 = vsub.f32 %v1009, %v1592
        %1594 = vmatpush.msra.mxu0 %v1593
        %v1595 = vand.u32 %v1008, 4294901760
        %v1596 = vsub.f32 %v1008, %v1595
        %1597 = vmatpush.msra.mxu0 %v1596
        %v1598 = vand.u32 %v1007, 4294901760
        %v1599 = vsub.f32 %v1007, %v1598
        %1600 = vmatpush.msra.mxu0 %v1599
        %v1601 = vand.u32 %v1006, 4294901760
        %v1602 = vsub.f32 %v1006, %v1601
        %1603 = vmatpush.msra.mxu0 %v1602
        %v1604 = vand.u32 %v1005, 4294901760
        %v1605 = vsub.f32 %v1005, %v1604
        %1606 = vmatpush.msra.mxu0 %v1605
        %v1607 = vand.u32 %v1004, 4294901760
        %v1608 = vsub.f32 %v1004, %v1607
        %1609 = vmatpush.msra.mxu0 %v1608
        %v1610 = vand.u32 %v1003, 4294901760
        %v1611 = vsub.f32 %v1003, %v1610
        %1612 = vmatpush.msra.mxu0 %v1611
        %v1613 = vand.u32 %v975, 4294901760
        %v1614 = vsub.f32 %v975, %v1613
        %1615 = vmatmul.f32.gmra.mxu0 %v1614
        %v1616 = vpop.f32.mrf.mxu0
        %v1617 = vadd.f32 %v1559, %v1616
        %v1618 = vand.u32 %v977, 4294901760
        %v1619 = vsub.f32 %v977, %v1618
        %1620 = vmatmul.f32.gmra.mxu0 %v1619
        %v1621 = vpop.f32.mrf.mxu0
        %v1622 = vadd.f32 %v1563, %v1621
        %1623 = vdwg.mxu0
        %v1624 = vand.u32 %v1018, 4294901760
        %1625 = vmatpush.msra.mxu0 %v1624
        %v1626 = vand.u32 %v1017, 4294901760
        %1627 = vmatpush.msra.mxu0 %v1626
        %v1628 = vand.u32 %v1016, 4294901760
        %1629 = vmatpush.msra.mxu0 %v1628
        %v1630 = vand.u32 %v1015, 4294901760
        %1631 = vmatpush.msra.mxu0 %v1630
        %v1632 = vand.u32 %v1014, 4294901760
        %1633 = vmatpush.msra.mxu0 %v1632
        %v1634 = vand.u32 %v1013, 4294901760
        %1635 = vmatpush.msra.mxu0 %v1634
        %v1636 = vand.u32 %v1012, 4294901760
        %1637 = vmatpush.msra.mxu0 %v1636
        %v1638 = vand.u32 %v1011, 4294901760
        %1639 = vmatpush.msra.mxu0 %v1638
        %v1640 = vand.u32 %v1010, 4294901760
        %1641 = vmatpush.msra.mxu0 %v1640
        %v1642 = vand.u32 %v1009, 4294901760
        %1643 = vmatpush.msra.mxu0 %v1642
        %v1644 = vand.u32 %v1008, 4294901760
        %1645 = vmatpush.msra.mxu0 %v1644
        %v1646 = vand.u32 %v1007, 4294901760
        %1647 = vmatpush.msra.mxu0 %v1646
        %v1648 = vand.u32 %v1006, 4294901760
        %1649 = vmatpush.msra.mxu0 %v1648
        %v1650 = vand.u32 %v1005, 4294901760
        %1651 = vmatpush.msra.mxu0 %v1650
        %v1652 = vand.u32 %v1004, 4294901760
        %1653 = vmatpush.msra.mxu0 %v1652
        %v1654 = vand.u32 %v1003, 4294901760
        %1655 = vmatpush.msra.mxu0 %v1654
        %v1656 = vand.u32 %v975, 4294901760
        %v1657 = vsub.f32 %v975, %v1656
        %v1658 = vand.u32 %v1657, 4294901760
        %1659 = vmatmul.f32.gmra.mxu0 %v1658
        %v1660 = vpop.f32.mrf.mxu0
        %v1661 = vadd.f32 %v1617, %v1660
        %v1662 = vand.u32 %v977, 4294901760
        %v1663 = vsub.f32 %v977, %v1662
        %v1664 = vand.u32 %v1663, 4294901760
        %1665 = vmatmul.f32.gmra.mxu0 %v1664
        %v1666 = vpop.f32.mrf.mxu0
        %v1667 = vadd.f32 %v1622, %v1666
        %1668 = vdwg.mxu0
        %v1669 = vand.u32 %v1018, 4294901760
        %v1670 = vsub.f32 %v1018, %v1669
        %v1671 = vand.u32 %v1670, 4294901760
        %1672 = vmatpush.msra.mxu0 %v1671
        %v1673 = vand.u32 %v1017, 4294901760
        %v1674 = vsub.f32 %v1017, %v1673
        %v1675 = vand.u32 %v1674, 4294901760
        %1676 = vmatpush.msra.mxu0 %v1675
        %v1677 = vand.u32 %v1016, 4294901760
        %v1678 = vsub.f32 %v1016, %v1677
        %v1679 = vand.u32 %v1678, 4294901760
        %1680 = vmatpush.msra.mxu0 %v1679
        %v1681 = vand.u32 %v1015, 4294901760
        %v1682 = vsub.f32 %v1015, %v1681
        %v1683 = vand.u32 %v1682, 4294901760
        %1684 = vmatpush.msra.mxu0 %v1683
        %v1685 = vand.u32 %v1014, 4294901760
        %v1686 = vsub.f32 %v1014, %v1685
        %v1687 = vand.u32 %v1686, 4294901760
        %1688 = vmatpush.msra.mxu0 %v1687
        %v1689 = vand.u32 %v1013, 4294901760
        %v1690 = vsub.f32 %v1013, %v1689
        %v1691 = vand.u32 %v1690, 4294901760
        %1692 = vmatpush.msra.mxu0 %v1691
        %v1693 = vand.u32 %v1012, 4294901760
        %v1694 = vsub.f32 %v1012, %v1693
        %v1695 = vand.u32 %v1694, 4294901760
        %1696 = vmatpush.msra.mxu0 %v1695
        %v1697 = vand.u32 %v1011, 4294901760
        %v1698 = vsub.f32 %v1011, %v1697
        %v1699 = vand.u32 %v1698, 4294901760
        %1700 = vmatpush.msra.mxu0 %v1699
        %v1701 = vand.u32 %v1010, 4294901760
        %v1702 = vsub.f32 %v1010, %v1701
        %v1703 = vand.u32 %v1702, 4294901760
        %1704 = vmatpush.msra.mxu0 %v1703
        %v1705 = vand.u32 %v1009, 4294901760
        %v1706 = vsub.f32 %v1009, %v1705
        %v1707 = vand.u32 %v1706, 4294901760
        %1708 = vmatpush.msra.mxu0 %v1707
        %v1709 = vand.u32 %v1008, 4294901760
        %v1710 = vsub.f32 %v1008, %v1709
        %v1711 = vand.u32 %v1710, 4294901760
        %1712 = vmatpush.msra.mxu0 %v1711
        %v1713 = vand.u32 %v1007, 4294901760
        %v1714 = vsub.f32 %v1007, %v1713
        %v1715 = vand.u32 %v1714, 4294901760
        %1716 = vmatpush.msra.mxu0 %v1715
        %v1717 = vand.u32 %v1006, 4294901760
        %v1718 = vsub.f32 %v1006, %v1717
        %v1719 = vand.u32 %v1718, 4294901760
        %1720 = vmatpush.msra.mxu0 %v1719
        %v1721 = vand.u32 %v1005, 4294901760
        %v1722 = vsub.f32 %v1005, %v1721
        %v1723 = vand.u32 %v1722, 4294901760
        %1724 = vmatpush.msra.mxu0 %v1723
        %v1725 = vand.u32 %v1004, 4294901760
        %v1726 = vsub.f32 %v1004, %v1725
        %v1727 = vand.u32 %v1726, 4294901760
        %1728 = vmatpush.msra.mxu0 %v1727
        %v1729 = vand.u32 %v1003, 4294901760
        %v1730 = vsub.f32 %v1003, %v1729
        %v1731 = vand.u32 %v1730, 4294901760
        %1732 = vmatpush.msra.mxu0 %v1731
        %v1733 = vand.u32 %v975, 4294901760
        %1734 = vmatmul.f32.gmra.mxu0 %v1733
        %v1735 = vpop.f32.mrf.mxu0
        %v1736 = vadd.f32 %v1661, %v1735
        %v1737 = vand.u32 %v977, 4294901760
        %1738 = vmatmul.f32.gmra.mxu0 %v1737
        %v1739 = vpop.f32.mrf.mxu0
        %v1740 = vadd.f32 %v1667, %v1739
        %1741 = vdwg.mxu0
        %v1742 = vand.u32 %v1018, 4294901760
        %1743 = vmatpush.msra.mxu0 %v1742
        %v1744 = vand.u32 %v1017, 4294901760
        %1745 = vmatpush.msra.mxu0 %v1744
        %v1746 = vand.u32 %v1016, 4294901760
        %1747 = vmatpush.msra.mxu0 %v1746
        %v1748 = vand.u32 %v1015, 4294901760
        %1749 = vmatpush.msra.mxu0 %v1748
        %v1750 = vand.u32 %v1014, 4294901760
        %1751 = vmatpush.msra.mxu0 %v1750
        %v1752 = vand.u32 %v1013, 4294901760
        %1753 = vmatpush.msra.mxu0 %v1752
        %v1754 = vand.u32 %v1012, 4294901760
        %1755 = vmatpush.msra.mxu0 %v1754
        %v1756 = vand.u32 %v1011, 4294901760
        %1757 = vmatpush.msra.mxu0 %v1756
        %v1758 = vand.u32 %v1010, 4294901760
        %1759 = vmatpush.msra.mxu0 %v1758
        %v1760 = vand.u32 %v1009, 4294901760
        %1761 = vmatpush.msra.mxu0 %v1760
        %v1762 = vand.u32 %v1008, 4294901760
        %1763 = vmatpush.msra.mxu0 %v1762
        %v1764 = vand.u32 %v1007, 4294901760
        %1765 = vmatpush.msra.mxu0 %v1764
        %v1766 = vand.u32 %v1006, 4294901760
        %1767 = vmatpush.msra.mxu0 %v1766
        %v1768 = vand.u32 %v1005, 4294901760
        %1769 = vmatpush.msra.mxu0 %v1768
        %v1770 = vand.u32 %v1004, 4294901760
        %1771 = vmatpush.msra.mxu0 %v1770
        %v1772 = vand.u32 %v1003, 4294901760
        %1773 = vmatpush.msra.mxu0 %v1772
        %v1774 = vand.u32 %v975, 4294901760
        %1775 = vmatmul.f32.gmra.mxu0 %v1774
        %v1776 = vpop.f32.mrf.mxu0
        %v1777 = vadd.f32 %v1736, %v1776
        %v1778 = vand.u32 %v977, 4294901760
        %1779 = vmatmul.f32.gmra.mxu0 %v1778
        %v1780 = vpop.f32.mrf.mxu0
        %v1781 = vadd.f32 %v1740, %v1780
        %1782 = vdwg.mxu0
        %v1783 = vand.u32 %v1034, 4294901760
        %1784 = vmatpush.msra.mxu0 %v1783
        %v1785 = vand.u32 %v1033, 4294901760
        %1786 = vmatpush.msra.mxu0 %v1785
        %v1787 = vand.u32 %v1032, 4294901760
        %1788 = vmatpush.msra.mxu0 %v1787
        %v1789 = vand.u32 %v1031, 4294901760
        %1790 = vmatpush.msra.mxu0 %v1789
        %v1791 = vand.u32 %v1030, 4294901760
        %1792 = vmatpush.msra.mxu0 %v1791
        %v1793 = vand.u32 %v1029, 4294901760
        %1794 = vmatpush.msra.mxu0 %v1793
        %v1795 = vand.u32 %v1028, 4294901760
        %1796 = vmatpush.msra.mxu0 %v1795
        %v1797 = vand.u32 %v1027, 4294901760
        %1798 = vmatpush.msra.mxu0 %v1797
        %v1799 = vand.u32 %v1026, 4294901760
        %1800 = vmatpush.msra.mxu0 %v1799
        %v1801 = vand.u32 %v1025, 4294901760
        %1802 = vmatpush.msra.mxu0 %v1801
        %v1803 = vand.u32 %v1024, 4294901760
        %1804 = vmatpush.msra.mxu0 %v1803
        %v1805 = vand.u32 %v1023, 4294901760
        %1806 = vmatpush.msra.mxu0 %v1805
        %v1807 = vand.u32 %v1022, 4294901760
        %1808 = vmatpush.msra.mxu0 %v1807
        %v1809 = vand.u32 %v1021, 4294901760
        %1810 = vmatpush.msra.mxu0 %v1809
        %v1811 = vand.u32 %v1020, 4294901760
        %1812 = vmatpush.msra.mxu0 %v1811
        %v1813 = vand.u32 %v1019, 4294901760
        %1814 = vmatpush.msra.mxu0 %v1813
        %v1815 = vand.u32 %v982, 4294901760
        %v1816 = vsub.f32 %v982, %v1815
        %v1817 = vand.u32 %v1816, 4294901760
        %v1818 = vsub.f32 %v1816, %v1817
        %v1819 = vand.u32 %v1818, 4294901760
        %1820 = vmatmul.f32.gmra.mxu0 %v1819
        %v1821 = vpop.f32.mrf.mxu0
        %v1822 = vadd.f32 %v1777, %v1821
        %v1823 = vand.u32 %v984, 4294901760
        %v1824 = vsub.f32 %v984, %v1823
        %v1825 = vand.u32 %v1824, 4294901760
        %v1826 = vsub.f32 %v1824, %v1825
        %v1827 = vand.u32 %v1826, 4294901760
        %1828 = vmatmul.f32.gmra.mxu0 %v1827
        %v1829 = vpop.f32.mrf.mxu0
        %v1830 = vadd.f32 %v1781, %v1829
        %1831 = vdwg.mxu0
        %v1832 = vand.u32 %v1034, 4294901760
        %v1833 = vsub.f32 %v1034, %v1832
        %v1834 = vand.u32 %v1833, 4294901760
        %v1835 = vsub.f32 %v1833, %v1834
        %v1836 = vand.u32 %v1835, 4294901760
        %1837 = vmatpush.msra.mxu0 %v1836
        %v1838 = vand.u32 %v1033, 4294901760
        %v1839 = vsub.f32 %v1033, %v1838
        %v1840 = vand.u32 %v1839, 4294901760
        %v1841 = vsub.f32 %v1839, %v1840
        %v1842 = vand.u32 %v1841, 4294901760
        %1843 = vmatpush.msra.mxu0 %v1842
        %v1844 = vand.u32 %v1032, 4294901760
        %v1845 = vsub.f32 %v1032, %v1844
        %v1846 = vand.u32 %v1845, 4294901760
        %v1847 = vsub.f32 %v1845, %v1846
        %v1848 = vand.u32 %v1847, 4294901760
        %1849 = vmatpush.msra.mxu0 %v1848
        %v1850 = vand.u32 %v1031, 4294901760
        %v1851 = vsub.f32 %v1031, %v1850
        %v1852 = vand.u32 %v1851, 4294901760
        %v1853 = vsub.f32 %v1851, %v1852
        %v1854 = vand.u32 %v1853, 4294901760
        %1855 = vmatpush.msra.mxu0 %v1854
        %v1856 = vand.u32 %v1030, 4294901760
        %v1857 = vsub.f32 %v1030, %v1856
        %v1858 = vand.u32 %v1857, 4294901760
        %v1859 = vsub.f32 %v1857, %v1858
        %v1860 = vand.u32 %v1859, 4294901760
        %1861 = vmatpush.msra.mxu0 %v1860
        %v1862 = vand.u32 %v1029, 4294901760
        %v1863 = vsub.f32 %v1029, %v1862
        %v1864 = vand.u32 %v1863, 4294901760
        %v1865 = vsub.f32 %v1863, %v1864
        %v1866 = vand.u32 %v1865, 4294901760
        %1867 = vmatpush.msra.mxu0 %v1866
        %v1868 = vand.u32 %v1028, 4294901760
        %v1869 = vsub.f32 %v1028, %v1868
        %v1870 = vand.u32 %v1869, 4294901760
        %v1871 = vsub.f32 %v1869, %v1870
        %v1872 = vand.u32 %v1871, 4294901760
        %1873 = vmatpush.msra.mxu0 %v1872
        %v1874 = vand.u32 %v1027, 4294901760
        %v1875 = vsub.f32 %v1027, %v1874
        %v1876 = vand.u32 %v1875, 4294901760
        %v1877 = vsub.f32 %v1875, %v1876
        %v1878 = vand.u32 %v1877, 4294901760
        %1879 = vmatpush.msra.mxu0 %v1878
        %v1880 = vand.u32 %v1026, 4294901760
        %v1881 = vsub.f32 %v1026, %v1880
        %v1882 = vand.u32 %v1881, 4294901760
        %v1883 = vsub.f32 %v1881, %v1882
        %v1884 = vand.u32 %v1883, 4294901760
        %1885 = vmatpush.msra.mxu0 %v1884
        %v1886 = vand.u32 %v1025, 4294901760
        %v1887 = vsub.f32 %v1025, %v1886
        %v1888 = vand.u32 %v1887, 4294901760
        %v1889 = vsub.f32 %v1887, %v1888
        %v1890 = vand.u32 %v1889, 4294901760
        %1891 = vmatpush.msra.mxu0 %v1890
        %v1892 = vand.u32 %v1024, 4294901760
        %v1893 = vsub.f32 %v1024, %v1892
        %v1894 = vand.u32 %v1893, 4294901760
        %v1895 = vsub.f32 %v1893, %v1894
        %v1896 = vand.u32 %v1895, 4294901760
        %1897 = vmatpush.msra.mxu0 %v1896
        %v1898 = vand.u32 %v1023, 4294901760
        %v1899 = vsub.f32 %v1023, %v1898
        %v1900 = vand.u32 %v1899, 4294901760
        %v1901 = vsub.f32 %v1899, %v1900
        %v1902 = vand.u32 %v1901, 4294901760
        %1903 = vmatpush.msra.mxu0 %v1902
        %v1904 = vand.u32 %v1022, 4294901760
        %v1905 = vsub.f32 %v1022, %v1904
        %v1906 = vand.u32 %v1905, 4294901760
        %v1907 = vsub.f32 %v1905, %v1906
        %v1908 = vand.u32 %v1907, 4294901760
        %1909 = vmatpush.msra.mxu0 %v1908
        %v1910 = vand.u32 %v1021, 4294901760
        %v1911 = vsub.f32 %v1021, %v1910
        %v1912 = vand.u32 %v1911, 4294901760
        %v1913 = vsub.f32 %v1911, %v1912
        %v1914 = vand.u32 %v1913, 4294901760
        %1915 = vmatpush.msra.mxu0 %v1914
        %v1916 = vand.u32 %v1020, 4294901760
        %v1917 = vsub.f32 %v1020, %v1916
        %v1918 = vand.u32 %v1917, 4294901760
        %v1919 = vsub.f32 %v1917, %v1918
        %v1920 = vand.u32 %v1919, 4294901760
        %1921 = vmatpush.msra.mxu0 %v1920
        %v1922 = vand.u32 %v1019, 4294901760
        %v1923 = vsub.f32 %v1019, %v1922
        %v1924 = vand.u32 %v1923, 4294901760
        %v1925 = vsub.f32 %v1923, %v1924
        %v1926 = vand.u32 %v1925, 4294901760
        %1927 = vmatpush.msra.mxu0 %v1926
        %v1928 = vand.u32 %v982, 4294901760
        %1929 = vmatmul.f32.gmra.mxu0 %v1928
        %v1930 = vpop.f32.mrf.mxu0
        %v1931 = vadd.f32 %v1822, %v1930
        %v1932 = vand.u32 %v984, 4294901760
        %1933 = vmatmul.f32.gmra.mxu0 %v1932
        %v1934 = vpop.f32.mrf.mxu0
        %v1935 = vadd.f32 %v1830, %v1934
        %1936 = vdwg.mxu0
        %v1937 = vand.u32 %v1034, 4294901760
        %v1938 = vsub.f32 %v1034, %v1937
        %1939 = vmatpush.msra.mxu0 %v1938
        %v1940 = vand.u32 %v1033, 4294901760
        %v1941 = vsub.f32 %v1033, %v1940
        %1942 = vmatpush.msra.mxu0 %v1941
        %v1943 = vand.u32 %v1032, 4294901760
        %v1944 = vsub.f32 %v1032, %v1943
        %1945 = vmatpush.msra.mxu0 %v1944
        %v1946 = vand.u32 %v1031, 4294901760
        %v1947 = vsub.f32 %v1031, %v1946
        %1948 = vmatpush.msra.mxu0 %v1947
        %v1949 = vand.u32 %v1030, 4294901760
        %v1950 = vsub.f32 %v1030, %v1949
        %1951 = vmatpush.msra.mxu0 %v1950
        %v1952 = vand.u32 %v1029, 4294901760
        %v1953 = vsub.f32 %v1029, %v1952
        %1954 = vmatpush.msra.mxu0 %v1953
        %v1955 = vand.u32 %v1028, 4294901760
        %v1956 = vsub.f32 %v1028, %v1955
        %1957 = vmatpush.msra.mxu0 %v1956
        %v1958 = vand.u32 %v1027, 4294901760
        %v1959 = vsub.f32 %v1027, %v1958
        %1960 = vmatpush.msra.mxu0 %v1959
        %v1961 = vand.u32 %v1026, 4294901760
        %v1962 = vsub.f32 %v1026, %v1961
        %1963 = vmatpush.msra.mxu0 %v1962
        %v1964 = vand.u32 %v1025, 4294901760
        %v1965 = vsub.f32 %v1025, %v1964
        %1966 = vmatpush.msra.mxu0 %v1965
        %v1967 = vand.u32 %v1024, 4294901760
        %v1968 = vsub.f32 %v1024, %v1967
        %1969 = vmatpush.msra.mxu0 %v1968
        %v1970 = vand.u32 %v1023, 4294901760
        %v1971 = vsub.f32 %v1023, %v1970
        %1972 = vmatpush.msra.mxu0 %v1971
        %v1973 = vand.u32 %v1022, 4294901760
        %v1974 = vsub.f32 %v1022, %v1973
        %1975 = vmatpush.msra.mxu0 %v1974
        %v1976 = vand.u32 %v1021, 4294901760
        %v1977 = vsub.f32 %v1021, %v1976
        %1978 = vmatpush.msra.mxu0 %v1977
        %v1979 = vand.u32 %v1020, 4294901760
        %v1980 = vsub.f32 %v1020, %v1979
        %1981 = vmatpush.msra.mxu0 %v1980
        %v1982 = vand.u32 %v1019, 4294901760
        %v1983 = vsub.f32 %v1019, %v1982
        %1984 = vmatpush.msra.mxu0 %v1983
        %v1985 = vand.u32 %v982, 4294901760
        %v1986 = vsub.f32 %v982, %v1985
        %1987 = vmatmul.f32.gmra.mxu0 %v1986
        %v1988 = vpop.f32.mrf.mxu0
        %v1989 = vadd.f32 %v1931, %v1988
        %v1990 = vand.u32 %v984, 4294901760
        %v1991 = vsub.f32 %v984, %v1990
        %1992 = vmatmul.f32.gmra.mxu0 %v1991
        %v1993 = vpop.f32.mrf.mxu0
        %v1994 = vadd.f32 %v1935, %v1993
        %1995 = vdwg.mxu0
        %v1996 = vand.u32 %v1034, 4294901760
        %1997 = vmatpush.msra.mxu0 %v1996
        %v1998 = vand.u32 %v1033, 4294901760
        %1999 = vmatpush.msra.mxu0 %v1998
        %v2000 = vand.u32 %v1032, 4294901760
        %2001 = vmatpush.msra.mxu0 %v2000
        %v2002 = vand.u32 %v1031, 4294901760
        %2003 = vmatpush.msra.mxu0 %v2002
        %v2004 = vand.u32 %v1030, 4294901760
        %2005 = vmatpush.msra.mxu0 %v2004
        %v2006 = vand.u32 %v1029, 4294901760
        %2007 = vmatpush.msra.mxu0 %v2006
        %v2008 = vand.u32 %v1028, 4294901760
        %2009 = vmatpush.msra.mxu0 %v2008
        %v2010 = vand.u32 %v1027, 4294901760
        %2011 = vmatpush.msra.mxu0 %v2010
        %v2012 = vand.u32 %v1026, 4294901760
        %2013 = vmatpush.msra.mxu0 %v2012
        %v2014 = vand.u32 %v1025, 4294901760
        %2015 = vmatpush.msra.mxu0 %v2014
        %v2016 = vand.u32 %v1024, 4294901760
        %2017 = vmatpush.msra.mxu0 %v2016
        %v2018 = vand.u32 %v1023, 4294901760
        %2019 = vmatpush.msra.mxu0 %v2018
        %v2020 = vand.u32 %v1022, 4294901760
        %2021 = vmatpush.msra.mxu0 %v2020
        %v2022 = vand.u32 %v1021, 4294901760
        %2023 = vmatpush.msra.mxu0 %v2022
        %v2024 = vand.u32 %v1020, 4294901760
        %2025 = vmatpush.msra.mxu0 %v2024
        %v2026 = vand.u32 %v1019, 4294901760
        %2027 = vmatpush.msra.mxu0 %v2026
        %v2028 = vand.u32 %v982, 4294901760
        %v2029 = vsub.f32 %v982, %v2028
        %v2030 = vand.u32 %v2029, 4294901760
        %2031 = vmatmul.f32.gmra.mxu0 %v2030
        %v2032 = vpop.f32.mrf.mxu0
        %v2033 = vadd.f32 %v1989, %v2032
        %v2034 = vand.u32 %v984, 4294901760
        %v2035 = vsub.f32 %v984, %v2034
        %v2036 = vand.u32 %v2035, 4294901760
        %2037 = vmatmul.f32.gmra.mxu0 %v2036
        %v2038 = vpop.f32.mrf.mxu0
        %v2039 = vadd.f32 %v1994, %v2038
        %2040 = vdwg.mxu0
        %v2041 = vand.u32 %v1034, 4294901760
        %v2042 = vsub.f32 %v1034, %v2041
        %v2043 = vand.u32 %v2042, 4294901760
        %2044 = vmatpush.msra.mxu0 %v2043
        %v2045 = vand.u32 %v1033, 4294901760
        %v2046 = vsub.f32 %v1033, %v2045
        %v2047 = vand.u32 %v2046, 4294901760
        %2048 = vmatpush.msra.mxu0 %v2047
        %v2049 = vand.u32 %v1032, 4294901760
        %v2050 = vsub.f32 %v1032, %v2049
        %v2051 = vand.u32 %v2050, 4294901760
        %2052 = vmatpush.msra.mxu0 %v2051
        %v2053 = vand.u32 %v1031, 4294901760
        %v2054 = vsub.f32 %v1031, %v2053
        %v2055 = vand.u32 %v2054, 4294901760
        %2056 = vmatpush.msra.mxu0 %v2055
        %v2057 = vand.u32 %v1030, 4294901760
        %v2058 = vsub.f32 %v1030, %v2057
        %v2059 = vand.u32 %v2058, 4294901760
        %2060 = vmatpush.msra.mxu0 %v2059
        %v2061 = vand.u32 %v1029, 4294901760
        %v2062 = vsub.f32 %v1029, %v2061
        %v2063 = vand.u32 %v2062, 4294901760
        %2064 = vmatpush.msra.mxu0 %v2063
        %v2065 = vand.u32 %v1028, 4294901760
        %v2066 = vsub.f32 %v1028, %v2065
        %v2067 = vand.u32 %v2066, 4294901760
        %2068 = vmatpush.msra.mxu0 %v2067
        %v2069 = vand.u32 %v1027, 4294901760
        %v2070 = vsub.f32 %v1027, %v2069
        %v2071 = vand.u32 %v2070, 4294901760
        %2072 = vmatpush.msra.mxu0 %v2071
        %v2073 = vand.u32 %v1026, 4294901760
        %v2074 = vsub.f32 %v1026, %v2073
        %v2075 = vand.u32 %v2074, 4294901760
        %2076 = vmatpush.msra.mxu0 %v2075
        %v2077 = vand.u32 %v1025, 4294901760
        %v2078 = vsub.f32 %v1025, %v2077
        %v2079 = vand.u32 %v2078, 4294901760
        %2080 = vmatpush.msra.mxu0 %v2079
        %v2081 = vand.u32 %v1024, 4294901760
        %v2082 = vsub.f32 %v1024, %v2081
        %v2083 = vand.u32 %v2082, 4294901760
        %2084 = vmatpush.msra.mxu0 %v2083
        %v2085 = vand.u32 %v1023, 4294901760
        %v2086 = vsub.f32 %v1023, %v2085
        %v2087 = vand.u32 %v2086, 4294901760
        %2088 = vmatpush.msra.mxu0 %v2087
        %v2089 = vand.u32 %v1022, 4294901760
        %v2090 = vsub.f32 %v1022, %v2089
        %v2091 = vand.u32 %v2090, 4294901760
        %2092 = vmatpush.msra.mxu0 %v2091
        %v2093 = vand.u32 %v1021, 4294901760
        %v2094 = vsub.f32 %v1021, %v2093
        %v2095 = vand.u32 %v2094, 4294901760
        %2096 = vmatpush.msra.mxu0 %v2095
        %v2097 = vand.u32 %v1020, 4294901760
        %v2098 = vsub.f32 %v1020, %v2097
        %v2099 = vand.u32 %v2098, 4294901760
        %2100 = vmatpush.msra.mxu0 %v2099
        %v2101 = vand.u32 %v1019, 4294901760
        %v2102 = vsub.f32 %v1019, %v2101
        %v2103 = vand.u32 %v2102, 4294901760
        %2104 = vmatpush.msra.mxu0 %v2103
        %v2105 = vand.u32 %v982, 4294901760
        %2106 = vmatmul.f32.gmra.mxu0 %v2105
        %v2107 = vpop.f32.mrf.mxu0
        %v2108 = vadd.f32 %v2033, %v2107
        %v2109 = vand.u32 %v984, 4294901760
        %2110 = vmatmul.f32.gmra.mxu0 %v2109
        %v2111 = vpop.f32.mrf.mxu0
        %v2112 = vadd.f32 %v2039, %v2111
        %2113 = vdwg.mxu0
        %v2114 = vand.u32 %v1034, 4294901760
        %2115 = vmatpush.msra.mxu0 %v2114
        %v2116 = vand.u32 %v1033, 4294901760
        %2117 = vmatpush.msra.mxu0 %v2116
        %v2118 = vand.u32 %v1032, 4294901760
        %2119 = vmatpush.msra.mxu0 %v2118
        %v2120 = vand.u32 %v1031, 4294901760
        %2121 = vmatpush.msra.mxu0 %v2120
        %v2122 = vand.u32 %v1030, 4294901760
        %2123 = vmatpush.msra.mxu0 %v2122
        %v2124 = vand.u32 %v1029, 4294901760
        %2125 = vmatpush.msra.mxu0 %v2124
        %v2126 = vand.u32 %v1028, 4294901760
        %2127 = vmatpush.msra.mxu0 %v2126
        %v2128 = vand.u32 %v1027, 4294901760
        %2129 = vmatpush.msra.mxu0 %v2128
        %v2130 = vand.u32 %v1026, 4294901760
        %2131 = vmatpush.msra.mxu0 %v2130
        %v2132 = vand.u32 %v1025, 4294901760
        %2133 = vmatpush.msra.mxu0 %v2132
        %v2134 = vand.u32 %v1024, 4294901760
        %2135 = vmatpush.msra.mxu0 %v2134
        %v2136 = vand.u32 %v1023, 4294901760
        %2137 = vmatpush.msra.mxu0 %v2136
        %v2138 = vand.u32 %v1022, 4294901760
        %2139 = vmatpush.msra.mxu0 %v2138
        %v2140 = vand.u32 %v1021, 4294901760
        %2141 = vmatpush.msra.mxu0 %v2140
        %v2142 = vand.u32 %v1020, 4294901760
        %2143 = vmatpush.msra.mxu0 %v2142
        %v2144 = vand.u32 %v1019, 4294901760
        %2145 = vmatpush.msra.mxu0 %v2144
        %v2146 = vand.u32 %v982, 4294901760
        %2147 = vmatmul.f32.gmra.mxu0 %v2146
        %v2148 = vpop.f32.mrf.mxu0
        %v2149 = vadd.f32 %v2108, %v2148
        %v2150 = vand.u32 %v984, 4294901760
        %2151 = vmatmul.f32.gmra.mxu0 %v2150
        %v2152 = vpop.f32.mrf.mxu0
        %v2153 = vadd.f32 %v2112, %v2152
        %2154 = vdwg.mxu0
        %v2155 = vxor.u32 %v2149, 2147483648
        %v2156 = vxor.u32 %v2153, 2147483648
        %v2157 = vmul.f32 %v2155, 1.442695
        %v2158 = vpow.pop %v2157
        %v2159 = vmul.f32 %v2156, 1.442695
        %v2160 = vpow.pop %v2159
        %v2161 = vadd.f32 %v2158, 1.0
        %v2162 = vadd.f32 %v2160, 1.0
        %v2163 = vrcp.pop %v2161
        %v2164 = vmul.f32 %v2161, %v2163
        %v2165 = vsub.f32 1.0, %v2164
        %v2166 = vmul.f32 %v2163, %v2165
        %v2167 = vadd.f32 %v2163, %v2166
        %vm2168 = vweird.f32 %v2161
        %vm2169 = vweird.f32 %v2163
        %vm2170 = vmor %vm2168, %vm2169
        %v2171 = vsel %vm2170, %v2163, %v2167
        %v2172 = vand.u32 2147483647, %v2161
        %vm2173 = vcmp.eq.f32.partialorder %v2172, 8.507059e+37
        %v2174 = vand.u32 %v2161, 2147483648
        %v2175 = vor.u32 1.1754944e-38, %v2174
        %v2176 = vsel %vm2173, %v2175, %v2171
        %v2177 = vmul.f32 1.0, %v2176
        %v2178 = vrcp.pop %v2162
        %v2179 = vmul.f32 %v2162, %v2178
        %v2180 = vsub.f32 1.0, %v2179
        %v2181 = vmul.f32 %v2178, %v2180
        %v2182 = vadd.f32 %v2178, %v2181
        %vm2183 = vweird.f32 %v2162
        %vm2184 = vweird.f32 %v2178
        %vm2185 = vmor %vm2183, %vm2184
        %v2186 = vsel %vm2185, %v2178, %v2182
        %v2187 = vand.u32 2147483647, %v2162
        %vm2188 = vcmp.eq.f32.partialorder %v2187, 8.507059e+37
        %v2189 = vand.u32 %v2162, 2147483648
        %v2190 = vor.u32 1.1754944e-38, %v2189
        %v2191 = vsel %vm2188, %v2190, %v2186
        %v2192 = vmul.f32 1.0, %v2191
        %v2193 = vmul.f32 %v958, %v2177
        %v2194 = vmul.f32 %v959, %v2192
        %v2197 = vrot.slane %v2193, 7
        %v2198 = vrot.slane %v2194, 7
        %v2199 = vsel %vm962, %v2197, %v2198
        %v2203 = vsel %vm962, 0.0, %v2197
        %v2204 = vsel %vm962, %v2198, 0.0
        %2205 = vst [vmem:[%s258] sm:$0xff] %v2203
        %2206 = vst [vmem:[%s258 + $0x8] sm:$0xff] %v2199
        %2207 = vst [vmem:[%s258 + $0x10] sm:$0x3] %v2204
        %p2208 = scmp.lt.s32.totalorder %s18, 1
        %s2209 = scalar_select %p2208, %s18, 1
        %s2210 = smul.addr %s2209, 3
        %s2211 = smul.addr %s2210, 8
        %s2212 = scalar_lea.vmem %s5, %s2211
        // Predicated region
        $region49: #{tpu_custom_call.1} parent=39 // pred_check
          %p2213 = pneg %p146
        $region50: #{tpu_custom_call.1} parent=39 // pred_check_branch
          %2215 = sbr.rel (%p2213) target = $region52
        $region51: #{tpu_custom_call.1} parent=39 // pred_region
          _
        $region52: #{tpu_custom_call.1} parent=39 // pred_fallthru
          _
      $region40: #{tpu_custom_call.1} parent=5 // pred_fallthru
        _
      %p2216 = scmp.le.s32.totalorder 2, %s13
      // Predicated region
      $region53: #{tpu_custom_call.1} parent=5 // pred_check
        %p2217 = pneg %p2216
      $region54: #{tpu_custom_call.1} parent=5 // pred_check_branch
        %2219 = sbr.rel (%p2217) target = $region56
      $region55: #{tpu_custom_call.1} parent=5 // pred_region
        %s2220 = ssub.s32 %s13, 2
        // Predicated region
        $region57: #{tpu_custom_call.1} parent=55 // pred_check
          %p2221 = pneg %p152
        $region58: #{tpu_custom_call.1} parent=55 // pred_check_branch
          %2223 = sbr.rel (%p2221) target = $region60
        $region59: #{tpu_custom_call.1} parent=55 // pred_region
          %p2224 = scmp.lt.s32.totalorder %s19, 1
          %s2225 = scalar_select %p2224, %s19, 1
          %s2226 = smul.addr %s2225, 3
          %s2227 = smul.addr %s2226, 8
          %s2228 = scalar_lea.vmem %s5, %s2227
        $region60: #{tpu_custom_call.1} parent=55 // pred_fallthru
          _
      $region56: #{tpu_custom_call.1} parent=5 // pred_fallthru
        _
    $region6: #{tpu_custom_call.1} parent=1 // loop_footer
      %s17 = sadd.s32 1, %s13
    $region7: #{tpu_custom_call.1} parent=1 // loop_footer_branch
      %12 = sbr.rel target = $region3
    $region8: #{tpu_custom_call.1} parent=1 // loop_exit
      _
    %2229 = vsyncpa [#allocation3], 1
    %s2230 = scalar_lea.sflag [#allocation3], 1
    %2231 = vsyncpa %s2230, 1
    %2232 = vsyncpa [#allocation5], 1

</llo_original>
